<compile_context>
chip_gen: v7x
topology: tpu7x:2x2x1
jax: 0.10.0
libtpu: 0.0.40
codegen_flags: <defaults>
</compile_context>

<pallas_src>
import jax
import jax.numpy as jnp
import numpy as np
from jax import lax
from jax.experimental import pallas as pl
from jax.experimental.pallas import tpu as pltpu

NUM_BRANCH = 2     # num_branch
NUM_GROUP = 4      # num_group (grouped-conv groups; PyTorch default is 32, kernel is agnostic)
R = 16             # attention squeeze ratio
L = 32             # minimum hidden channels
EPS = 1e-5
PAD = NUM_BRANCH   # halo = max dilation
LANES = 128


def _pack_geometry(C, W):
    """Lane-packing geometry: lp spatial positions * C channels = 128 lanes."""
    assert LANES % C == 0, "channels must divide 128 for lane packing"
    lp = LANES // C                          # spatial positions folded into lanes
    assert W % lp == 0, "W must be a multiple of the lane-packing factor"
    assert (2 * PAD) % lp == 0, "halo must be a whole number of super-pixels"
    sp_w = W // lp                           # packed super-pixels per image row
    nro = 2 * PAD + 1                        # row offsets used by the taps (0..2*PAD)
    nco = (lp - 1 + 2 * PAD) // lp + 1       # column (super-pixel) offsets (=2 for C=32)
    return lp, sp_w, nro, nco


# ---------------------------------------------------------------------------
# Fused kernel: both branch convs + BN + ReLU + GAP + attention + weighted sum
# ---------------------------------------------------------------------------
def skconv_fused(xcols, wbig, bn_scale, bn_bias, wfc_t, fc_scale, fc_bias,
                 wfcs_merged, *, H, W, C, out_dtype=jnp.float32):
    B, nco, rows_pad, lanes = xcols.shape
    nb = NUM_BRANCH
    d = wfc_t.shape[1]
    lp, sp_w, nro, nco_chk = _pack_geometry(C, W)
    assert nco == nco_chk and lanes == LANES
    M = H * sp_w                              # packed output rows per sample
    ns = nro * nco                            # number of im2col slabs
    inv_hw = 1.0 / float(H * W)

    def kernel(x_ref, w_ref, bsc_ref, bbi_ref, wfc_ref, fsc_ref, fbi_ref,
               wfcs_ref, out_ref):
        # ---- im2col: lane-aligned row-window slabs concatenated along lanes ----
        slabs = []
        for r in range(nro):
            for c in range(nco):
                slabs.append(x_ref[0, c, r * sp_w:r * sp_w + M, :])   # (M, 128) bf16
        lhs = jnp.concatenate(slabs, axis=1)                          # (M, ns*128) bf16

        # ---- both branches' grouped dilated 3x3 convs in ONE MXU matmul ----
        conv = jnp.dot(lhs, w_ref[...],
                       preferred_element_type=jnp.float32)            # (M, nb*128) f32

        # ---- BN + ReLU per branch (lane-dense VPU), 128-aligned lane slices ----
        feats = []
        for br in range(nb):
            y = conv[:, br * LANES:(br + 1) * LANES]
            feats.append(jnp.maximum(y * bsc_ref[br] + bbi_ref[br], 0.0))

        # ---- global average pool of the branch sum (per packed lane) ----
        u = feats[0]
        for f in feats[1:]:
            u = u + f
        gap = jnp.sum(u, axis=0, keepdims=True) * inv_hw               # (1, 128)

        # ---- squeeze-excite attention (tiny matmuls; wfc tiled over sub-positions) ----
        z = jnp.dot(gap, wfc_ref[...], preferred_element_type=jnp.float32)      # (1, d)
        z = jnp.maximum(z * fsc_ref[...] + fbi_ref[...], 0.0)
        logits = jnp.dot(z, wfcs_ref[...], preferred_element_type=jnp.float32)  # (1, nb*C)
        per = [logits[:, br * C:(br + 1) * C] for br in range(nb)]
        m = per[0]
        for lg in per[1:]:
            m = jnp.maximum(m, lg)
        exps = [jnp.exp(lg - m) for lg in per]
        tot = exps[0]
        for e in exps[1:]:
            tot = tot + e
        inv = pl.reciprocal(tot, approx=True)                          # EUP slot, ~free

        # ---- attention-weighted branch sum, lane-dense output ----
        v = jnp.zeros((M, LANES), jnp.float32)
        for br in range(nb):
            attn = jnp.concatenate([exps[br] * inv] * lp, axis=1)      # (1, 128)
            v = v + feats[br] * attn
        out_ref[0] = v.astype(out_ref.dtype)

    return pl.pallas_call(
        kernel,
        out_shape=jax.ShapeDtypeStruct((B, M, LANES), out_dtype),
        grid=(B,),
        in_specs=[
            pl.BlockSpec((1, nco, rows_pad, LANES), lambda b: (b, 0, 0, 0)),  # packed image
            pl.BlockSpec((ns * LANES, nb * LANES), lambda b: (0, 0)),         # conv weight
            pl.BlockSpec((nb, 1, LANES), lambda b: (0, 0, 0)),                # bn scale
            pl.BlockSpec((nb, 1, LANES), lambda b: (0, 0, 0)),                # bn bias
            pl.BlockSpec((LANES, d), lambda b: (0, 0)),                       # fc weight (tiled)
            pl.BlockSpec((1, d), lambda b: (0, 0)),                           # fc bn scale
            pl.BlockSpec((1, d), lambda b: (0, 0)),                           # fc bn bias
            pl.BlockSpec((d, nb * C), lambda b: (0, 0)),                      # merged fcs weight
        ],
        out_specs=pl.BlockSpec((1, M, LANES), lambda b: (b, 0, 0)),
        compiler_params=pltpu.CompilerParams(
            dimension_semantics=("parallel",),
            vmem_limit_bytes=32 * 1024 * 1024,
        ),
    )(xcols, wbig, bn_scale, bn_bias, wfc_t, fc_scale, fc_bias, wfcs_merged)


# ---------------------------------------------------------------------------
# Full forward (NCHW in / NCHW out, like the PyTorch module)
# ---------------------------------------------------------------------------
def skconv_pallas(x_nchw, p, out_dtype=jnp.float32):
    B, C, H, W = x_nchw.shape
    lp, sp_w, nro, nco = _pack_geometry(C, W)
    Hp = H + 2 * PAD

    # NHWC + bf16 (fused with the transpose pass), halo-pad in XLA (layout plumbing).
    x = jnp.transpose(x_nchw, (0, 2, 3, 1)).astype(jnp.bfloat16)
    xpad = jnp.pad(x, ((0, 0), (PAD, PAD), (PAD, PAD), (0, 0)))       # (B, Hp, Wp, C)

    # One lane-packed copy per column (super-pixel) offset -> kernel only needs
    # contiguous row-window loads, no in-kernel reshapes / unaligned lane slices.
    cols = []
    for c in range(nco):
        sl = lax.slice_in_dim(xpad, c * lp, c * lp + W, axis=2)        # (B, Hp, W, C)
        cols.append(sl.reshape(B, Hp * sp_w, lp * C))                  # contiguous reshape
    xcols = jnp.stack(cols, axis=1)                                    # (B, nco, Hp*sp_w, 128)

    out = skconv_fused(xcols, p["wbig"], p["bn_scale128"], p["bn_bias128"],
                       p["wfc128"], p["fc_scale"], p["fc_bias"], p["wfcs_merged"],
                       H=H, W=W, C=C, out_dtype=out_dtype)
    out = out.reshape(B, H, W, C)                # free (contiguous) un-packing
    return jnp.transpose(out, (0, 3, 1, 2)).astype(jnp.float32)        # back to NCHW


# ---------------------------------------------------------------------------
# Deterministic parameter construction (mirrors the PyTorch module shapes)
# ---------------------------------------------------------------------------
def make_params(key, C):
    nb, G = NUM_BRANCH, NUM_GROUP
    d = max(C // R, L)
    Cg = C // G
    lp = LANES // C
    nro = 2 * PAD + 1
    nco = (lp - 1 + 2 * PAD) // lp + 1
    ks = jax.random.split(key, 12)

    conv_w = jax.random.normal(ks[0], (nb, C, Cg, 3, 3), jnp.float32) * 0.1
    gamma = jax.random.uniform(ks[1], (nb, C), minval=0.5, maxval=1.5)
    beta = jax.random.normal(ks[2], (nb, C)) * 0.1
    rmean = jax.random.normal(ks[3], (nb, C)) * 0.1
    rvar = jax.random.uniform(ks[4], (nb, C), minval=0.5, maxval=1.5)
    inv_std = 1.0 / jnp.sqrt(rvar + EPS)
    bn_scale = (gamma * inv_std).reshape(nb, 1, C)
    bn_bias = (beta - rmean * gamma * inv_std).reshape(nb, 1, C)

    # ---- pack both branches' grouped 3x3 taps into ONE (nro*nco*128, nb*128) matrix ----
    # K index = slab(row_off, col_off)*128 + sub_pos_in*C + ci ; N index = br*128 + sub_pos_out*C + co
    conv_np = np.asarray(conv_w)
    wbig = np.zeros((nro * nco * LANES, nb * LANES), np.float32)
    for br in range(nb):
        dil = br + 1
        for ky in range(3):
            r = PAD + (ky - 1) * dil                      # padded-row offset (0..2*PAD)
            for kx in range(3):
                ox = PAD + (kx - 1) * dil                 # padded-col offset (0..2*PAD)
                dense = np.zeros((C, C), np.float32)      # dense (Cin, Cout) block-diagonal tap
                for g in range(G):
                    blk = conv_np[br, g * Cg:(g + 1) * Cg, :, ky, kx]   # (Cg_out, Cg_in)
                    dense[g * Cg:(g + 1) * Cg, g * Cg:(g + 1) * Cg] = blk.T
                for a in range(lp):                       # output sub-position in the lane pack
                    t = a + ox
                    s = r * nco + t // lp                 # im2col slab index
                    ap = t % lp                           # input sub-position
                    k0 = s * LANES + ap * C
                    n0 = br * LANES + a * C
                    wbig[k0:k0 + C, n0:n0 + C] += dense
    wbig = jnp.asarray(wbig, dtype=jnp.bfloat16)

    bn_scale128 = jnp.asarray(np.tile(np.asarray(bn_scale), (1, 1, lp)))   # (nb, 1, 128)
    bn_bias128 = jnp.asarray(np.tile(np.asarray(bn_bias), (1, 1, lp)))

    wfc_pt = jax.random.normal(ks[5], (d, C)) * 0.1        # Conv2d(C, d, 1x1) weight
    fg = jax.random.uniform(ks[6], (d,), minval=0.5, maxval=1.5)
    fb = jax.random.normal(ks[7], (d,)) * 0.1
    fm = jax.random.normal(ks[8], (d,)) * 0.1
    fv = jax.random.uniform(ks[9], (d,), minval=0.5, maxval=1.5)
    finv = 1.0 / jnp.sqrt(fv + EPS)
    fc_scale = (fg * finv).reshape(1, d)
    fc_bias = (fb - fm * fg * finv).reshape(1, d)

    wfc = jnp.transpose(wfc_pt)                            # (C, d)
    wfc128 = jnp.asarray(np.tile(np.asarray(wfc), (lp, 1)))  # (128, d), tiled over sub-pos

    wfcs_pt = jax.random.normal(ks[10], (nb, C, d)) * 0.1  # Conv2d(d, C, 1x1) weights
    wfcs = jnp.transpose(wfcs_pt, (0, 2, 1))               # (nb, d, C)
    wfcs_merged = jnp.concatenate([wfcs[br] for br in range(nb)], axis=1)  # (d, nb*C)

    return {
        # raw params for the pure-JAX reference
        "conv_w": conv_w, "bn_scale": bn_scale, "bn_bias": bn_bias,
        "wfc": wfc, "wfcs": wfcs,
        # kernel-layout params
        "wbig": wbig, "bn_scale128": bn_scale128, "bn_bias128": bn_bias128,
        "wfc128": wfc128, "fc_scale": fc_scale, "fc_bias": fc_bias,
        "wfcs_merged": wfcs_merged,
    }


# ---------------------------------------------------------------------------
# Pure-JAX reference (for correctness check)
# ---------------------------------------------------------------------------
def skconv_ref(x_nchw, p):
    B, C, H, W = x_nchw.shape
    x = jnp.transpose(x_nchw, (0, 2, 3, 1))
    feats = []
    for br in range(NUM_BRANCH):
        dil = 1 + br
        kern = jnp.transpose(p["conv_w"][br], (2, 3, 1, 0))   # HWIO
        y = lax.conv_general_dilated(
            x, kern, window_strides=(1, 1),
            padding=[(dil, dil), (dil, dil)], rhs_dilation=(dil, dil),
            dimension_numbers=("NHWC", "HWIO", "NHWC"),
            feature_group_count=NUM_GROUP)
        y = jnp.maximum(y * p["bn_scale"][br] + p["bn_bias"][br], 0.0)
        feats.append(y)
    feats = jnp.stack(feats, axis=0)                          # (nb, B, H, W, C)
    u = jnp.sum(feats, axis=0)
    s = jnp.mean(u, axis=(1, 2))                              # (B, C)
    z = jnp.maximum((s @ p["wfc"]) * p["fc_scale"] + p["fc_bias"], 0.0)
    logits = jnp.stack([z @ p["wfcs"][br] for br in range(NUM_BRANCH)], axis=0)
    attn = jax.nn.softmax(logits, axis=0)                     # (nb, B, C)
    v = jnp.sum(attn[:, :, None, None, :] * feats, axis=0)    # (B, H, W, C)
    return jnp.transpose(v, (0, 3, 1, 2))


if __name__ == "__main__":
    B, C, H, W = 2, 32, 16, 16
    key = jax.random.PRNGKey(0)
    kx_, kp = jax.random.split(key)
    x = jax.random.normal(kx_, (B, C, H, W), jnp.float32)
    params = make_params(kp, C)

    out = jax.jit(skconv_pallas)(x, params)
    out = jax.block_until_ready(out)
    assert out.shape == (B, C, H, W)

    ref = skconv_ref(x, params)
    # tolerance loosened vs. pure-f32: MXU operands are bf16, softmax uses approx reciprocal
    np.testing.assert_allclose(np.asarray(out), np.asarray(ref), rtol=3e-2, atol=3e-2)
    print("KERNEL_OK")
</pallas_src>

<mosaic_0001>
module attributes {stable_mosaic.version = 11 : i64} {
  func.func @kernel(%arg0: i32, %arg1: memref<1x2x80x128xbf16, #tpu.memory_space<vmem>>, %arg2: memref<1280x256xbf16, #tpu.memory_space<vmem>>, %arg3: memref<2x1x128xf32, #tpu.memory_space<vmem>>, %arg4: memref<2x1x128xf32, #tpu.memory_space<vmem>>, %arg5: memref<128x32xf32, #tpu.memory_space<vmem>>, %arg6: memref<1x32xf32, #tpu.memory_space<vmem>>, %arg7: memref<1x32xf32, #tpu.memory_space<vmem>>, %arg8: memref<32x64xf32, #tpu.memory_space<vmem>>, %arg9: memref<1x64x128xf32, #tpu.memory_space<vmem>>) attributes {dimension_semantics = [#tpu.dimension_semantics<parallel>], iteration_bounds = array<i64: 2>, scalar_prefetch = 0 : i64, scratch_operands = 0 : i64, tpu.core_type = #tpu.core_type<tc>, window_params = [{transform_indices = @transform_0, window_bounds = array<i64: 1, 2, 80, 128>}, {pipeline_mode = #tpu.pipeline_mode<synchronous>, transform_indices = @transform_1, window_bounds = array<i64: 1280, 256>}, {pipeline_mode = #tpu.pipeline_mode<synchronous>, transform_indices = @transform_2, window_bounds = array<i64: 2, 1, 128>}, {pipeline_mode = #tpu.pipeline_mode<synchronous>, transform_indices = @transform_3, window_bounds = array<i64: 2, 1, 128>}, {pipeline_mode = #tpu.pipeline_mode<synchronous>, transform_indices = @transform_4, window_bounds = array<i64: 128, 32>}, {pipeline_mode = #tpu.pipeline_mode<synchronous>, transform_indices = @transform_5, window_bounds = array<i64: 1, 32>}, {pipeline_mode = #tpu.pipeline_mode<synchronous>, transform_indices = @transform_6, window_bounds = array<i64: 1, 32>}, {pipeline_mode = #tpu.pipeline_mode<synchronous>, transform_indices = @transform_7, window_bounds = array<i64: 32, 64>}, {transform_indices = @transform_8, window_bounds = array<i64: 1, 64, 128>}]} {
    %c0 = arith.constant 0 : index
    %c0_0 = arith.constant 0 : index
    %c0_1 = arith.constant 0 : index
    %c0_2 = arith.constant 0 : index
    %0 = vector.load %arg1[%c0, %c0_0, %c0_1, %c0_2] : memref<1x2x80x128xbf16, #tpu.memory_space<vmem>>, vector<1x1x64x128xbf16>
    %1 = vector.shape_cast %0 : vector<1x1x64x128xbf16> to vector<64x128xbf16>
    %c0_3 = arith.constant 0 : index
    %c1 = arith.constant 1 : index
    %c0_4 = arith.constant 0 : index
    %c0_5 = arith.constant 0 : index
    %2 = vector.load %arg1[%c0_3, %c1, %c0_4, %c0_5] : memref<1x2x80x128xbf16, #tpu.memory_space<vmem>>, vector<1x1x64x128xbf16>
    %3 = vector.shape_cast %2 : vector<1x1x64x128xbf16> to vector<64x128xbf16>
    %c0_6 = arith.constant 0 : index
    %c0_7 = arith.constant 0 : index
    %c4 = arith.constant 4 : index
    %c0_8 = arith.constant 0 : index
    %4 = vector.load %arg1[%c0_6, %c0_7, %c4, %c0_8] : memref<1x2x80x128xbf16, #tpu.memory_space<vmem>>, vector<1x1x64x128xbf16>
    %5 = vector.shape_cast %4 : vector<1x1x64x128xbf16> to vector<64x128xbf16>
    %c0_9 = arith.constant 0 : index
    %c1_10 = arith.constant 1 : index
    %c4_11 = arith.constant 4 : index
    %c0_12 = arith.constant 0 : index
    %6 = vector.load %arg1[%c0_9, %c1_10, %c4_11, %c0_12] : memref<1x2x80x128xbf16, #tpu.memory_space<vmem>>, vector<1x1x64x128xbf16>
    %7 = vector.shape_cast %6 : vector<1x1x64x128xbf16> to vector<64x128xbf16>
    %c0_13 = arith.constant 0 : index
    %c0_14 = arith.constant 0 : index
    %c8 = arith.constant 8 : index
    %c0_15 = arith.constant 0 : index
    %8 = vector.load %arg1[%c0_13, %c0_14, %c8, %c0_15] : memref<1x2x80x128xbf16, #tpu.memory_space<vmem>>, vector<1x1x64x128xbf16>
    %9 = vector.shape_cast %8 : vector<1x1x64x128xbf16> to vector<64x128xbf16>
    %c0_16 = arith.constant 0 : index
    %c1_17 = arith.constant 1 : index
    %c8_18 = arith.constant 8 : index
    %c0_19 = arith.constant 0 : index
    %10 = vector.load %arg1[%c0_16, %c1_17, %c8_18, %c0_19] : memref<1x2x80x128xbf16, #tpu.memory_space<vmem>>, vector<1x1x64x128xbf16>
    %11 = vector.shape_cast %10 : vector<1x1x64x128xbf16> to vector<64x128xbf16>
    %c0_20 = arith.constant 0 : index
    %c0_21 = arith.constant 0 : index
    %c12 = arith.constant 12 : index
    %c0_22 = arith.constant 0 : index
    %12 = vector.load %arg1[%c0_20, %c0_21, %c12, %c0_22] : memref<1x2x80x128xbf16, #tpu.memory_space<vmem>>, vector<1x1x64x128xbf16>
    %13 = vector.shape_cast %12 : vector<1x1x64x128xbf16> to vector<64x128xbf16>
    %c0_23 = arith.constant 0 : index
    %c1_24 = arith.constant 1 : index
    %c12_25 = arith.constant 12 : index
    %c0_26 = arith.constant 0 : index
    %14 = vector.load %arg1[%c0_23, %c1_24, %c12_25, %c0_26] : memref<1x2x80x128xbf16, #tpu.memory_space<vmem>>, vector<1x1x64x128xbf16>
    %15 = vector.shape_cast %14 : vector<1x1x64x128xbf16> to vector<64x128xbf16>
    %c0_27 = arith.constant 0 : index
    %c0_28 = arith.constant 0 : index
    %c16 = arith.constant 16 : index
    %c0_29 = arith.constant 0 : index
    %16 = vector.load %arg1[%c0_27, %c0_28, %c16, %c0_29] : memref<1x2x80x128xbf16, #tpu.memory_space<vmem>>, vector<1x1x64x128xbf16>
    %17 = vector.shape_cast %16 : vector<1x1x64x128xbf16> to vector<64x128xbf16>
    %c0_30 = arith.constant 0 : index
    %c1_31 = arith.constant 1 : index
    %c16_32 = arith.constant 16 : index
    %c0_33 = arith.constant 0 : index
    %18 = vector.load %arg1[%c0_30, %c1_31, %c16_32, %c0_33] : memref<1x2x80x128xbf16, #tpu.memory_space<vmem>>, vector<1x1x64x128xbf16>
    %19 = vector.shape_cast %18 : vector<1x1x64x128xbf16> to vector<64x128xbf16>
    %20 = tpu.concatenate %1, %3, %5, %7, %9, %11, %13, %15, %17, %19 in 1 : vector<64x128xbf16>, vector<64x128xbf16>, vector<64x128xbf16>, vector<64x128xbf16>, vector<64x128xbf16>, vector<64x128xbf16>, vector<64x128xbf16>, vector<64x128xbf16>, vector<64x128xbf16>, vector<64x128xbf16> -> vector<64x1280xbf16>
    %c0_34 = arith.constant 0 : index
    %c0_35 = arith.constant 0 : index
    %21 = vector.load %arg2[%c0_34, %c0_35] : memref<1280x256xbf16, #tpu.memory_space<vmem>>, vector<1280x256xbf16>
    %cst = arith.constant dense<0.000000e+00> : vector<64x256xf32>
    %22 = tpu.matmul %20, %21, %cst {dimension_numbers = #tpu.dot_dimension_numbers<[1], [0], [0], [1], [0, 0, 1, 1], [], []>} : vector<64x1280xbf16>, vector<1280x256xbf16>, vector<64x256xf32> -> vector<64x256xf32>
    %23 = vector.extract_strided_slice %22 {offsets = [0, 0], sizes = [64, 128], strides = [1, 1]} : vector<64x256xf32> to vector<64x128xf32>
    %c0_36 = arith.constant 0 : index
    %c0_37 = arith.constant 0 : index
    %c0_38 = arith.constant 0 : index
    %24 = vector.load %arg3[%c0_36, %c0_37, %c0_38] : memref<2x1x128xf32, #tpu.memory_space<vmem>>, vector<1x1x128xf32>
    %25 = vector.shape_cast %24 : vector<1x1x128xf32> to vector<1x128xf32>
    %26 = vector.broadcast %25 : vector<1x128xf32> to vector<64x128xf32>
    %27 = arith.mulf %23, %26 : vector<64x128xf32>
    %c0_39 = arith.constant 0 : index
    %c0_40 = arith.constant 0 : index
    %c0_41 = arith.constant 0 : index
    %28 = vector.load %arg4[%c0_39, %c0_40, %c0_41] : memref<2x1x128xf32, #tpu.memory_space<vmem>>, vector<1x1x128xf32>
    %29 = vector.shape_cast %28 : vector<1x1x128xf32> to vector<1x128xf32>
    %30 = vector.broadcast %29 : vector<1x128xf32> to vector<64x128xf32>
    %31 = arith.addf %27, %30 : vector<64x128xf32>
    %cst_42 = arith.constant 0.000000e+00 : f32
    %32 = vector.broadcast %cst_42 : f32 to vector<64x128xf32>
    %33 = arith.maximumf %31, %32 : vector<64x128xf32>
    %34 = vector.extract_strided_slice %22 {offsets = [0, 128], sizes = [64, 128], strides = [1, 1]} : vector<64x256xf32> to vector<64x128xf32>
    %c1_43 = arith.constant 1 : index
    %c0_44 = arith.constant 0 : index
    %c0_45 = arith.constant 0 : index
    %35 = vector.load %arg3[%c1_43, %c0_44, %c0_45] : memref<2x1x128xf32, #tpu.memory_space<vmem>>, vector<1x1x128xf32>
    %36 = vector.shape_cast %35 : vector<1x1x128xf32> to vector<1x128xf32>
    %37 = vector.broadcast %36 : vector<1x128xf32> to vector<64x128xf32>
    %38 = arith.mulf %34, %37 : vector<64x128xf32>
    %c1_46 = arith.constant 1 : index
    %c0_47 = arith.constant 0 : index
    %c0_48 = arith.constant 0 : index
    %39 = vector.load %arg4[%c1_46, %c0_47, %c0_48] : memref<2x1x128xf32, #tpu.memory_space<vmem>>, vector<1x1x128xf32>
    %40 = vector.shape_cast %39 : vector<1x1x128xf32> to vector<1x128xf32>
    %41 = vector.broadcast %40 : vector<1x128xf32> to vector<64x128xf32>
    %42 = arith.addf %38, %41 : vector<64x128xf32>
    %cst_49 = arith.constant 0.000000e+00 : f32
    %43 = vector.broadcast %cst_49 : f32 to vector<64x128xf32>
    %44 = arith.maximumf %42, %43 : vector<64x128xf32>
    %45 = arith.addf %33, %44 : vector<64x128xf32>
    %cst_50 = arith.constant dense<0.000000e+00> : vector<128xf32>
    %46 = vector.multi_reduction <add>, %45, %cst_50 [0] : vector<64x128xf32> to vector<128xf32>
    %47 = vector.shape_cast %46 : vector<128xf32> to vector<1x128xf32>
    %cst_51 = arith.constant 3.906250e-03 : f32
    %48 = vector.broadcast %cst_51 : f32 to vector<1x128xf32>
    %49 = arith.mulf %47, %48 : vector<1x128xf32>
    %c0_52 = arith.constant 0 : index
    %c0_53 = arith.constant 0 : index
    %50 = vector.load %arg5[%c0_52, %c0_53] : memref<128x32xf32, #tpu.memory_space<vmem>>, vector<128x32xf32>
    %cst_54 = arith.constant dense<0.000000e+00> : vector<1x32xf32>
    %51 = tpu.matmul %49, %50, %cst_54 {dimension_numbers = #tpu.dot_dimension_numbers<[1], [0], [0], [1], [0, 0, 1, 1], [], []>} : vector<1x128xf32>, vector<128x32xf32>, vector<1x32xf32> -> vector<1x32xf32>
    %c0_55 = arith.constant 0 : index
    %c0_56 = arith.constant 0 : index
    %52 = vector.load %arg6[%c0_55, %c0_56] : memref<1x32xf32, #tpu.memory_space<vmem>>, vector<1x32xf32>
    %53 = arith.mulf %51, %52 : vector<1x32xf32>
    %c0_57 = arith.constant 0 : index
    %c0_58 = arith.constant 0 : index
    %54 = vector.load %arg7[%c0_57, %c0_58] : memref<1x32xf32, #tpu.memory_space<vmem>>, vector<1x32xf32>
    %55 = arith.addf %53, %54 : vector<1x32xf32>
    %cst_59 = arith.constant 0.000000e+00 : f32
    %56 = vector.broadcast %cst_59 : f32 to vector<1x32xf32>
    %57 = arith.maximumf %55, %56 : vector<1x32xf32>
    %c0_60 = arith.constant 0 : index
    %c0_61 = arith.constant 0 : index
    %58 = vector.load %arg8[%c0_60, %c0_61] : memref<32x64xf32, #tpu.memory_space<vmem>>, vector<32x64xf32>
    %cst_62 = arith.constant dense<0.000000e+00> : vector<1x64xf32>
    %59 = tpu.matmul %57, %58, %cst_62 {dimension_numbers = #tpu.dot_dimension_numbers<[1], [0], [0], [1], [0, 0, 1, 1], [], []>} : vector<1x32xf32>, vector<32x64xf32>, vector<1x64xf32> -> vector<1x64xf32>
    %60 = vector.extract_strided_slice %59 {offsets = [0, 0], sizes = [1, 32], strides = [1, 1]} : vector<1x64xf32> to vector<1x32xf32>
    %61 = vector.extract_strided_slice %59 {offsets = [0, 32], sizes = [1, 32], strides = [1, 1]} : vector<1x64xf32> to vector<1x32xf32>
    %62 = arith.maximumf %60, %61 : vector<1x32xf32>
    %63 = arith.subf %60, %62 : vector<1x32xf32>
    %64 = math.exp %63 : vector<1x32xf32>
    %65 = arith.subf %61, %62 : vector<1x32xf32>
    %66 = math.exp %65 : vector<1x32xf32>
    %67 = arith.addf %64, %66 : vector<1x32xf32>
    %68 = tpu.reciprocal %67 {approx = true} : vector<1x32xf32> -> vector<1x32xf32>
    %cst_63 = arith.constant 0.000000e+00 : f32
    %69 = vector.broadcast %cst_63 : f32 to vector<64x128xf32>
    %70 = arith.mulf %64, %68 : vector<1x32xf32>
    %71 = tpu.concatenate %70, %70, %70, %70 in 1 : vector<1x32xf32>, vector<1x32xf32>, vector<1x32xf32>, vector<1x32xf32> -> vector<1x128xf32>
    %72 = vector.broadcast %71 : vector<1x128xf32> to vector<64x128xf32>
    %73 = arith.mulf %33, %72 : vector<64x128xf32>
    %74 = arith.addf %69, %73 : vector<64x128xf32>
    %75 = arith.mulf %66, %68 : vector<1x32xf32>
    %76 = tpu.concatenate %75, %75, %75, %75 in 1 : vector<1x32xf32>, vector<1x32xf32>, vector<1x32xf32>, vector<1x32xf32> -> vector<1x128xf32>
    %77 = vector.broadcast %76 : vector<1x128xf32> to vector<64x128xf32>
    %78 = arith.mulf %44, %77 : vector<64x128xf32>
    %79 = arith.addf %74, %78 : vector<64x128xf32>
    %c0_64 = arith.constant 0 : index
    %c0_65 = arith.constant 0 : index
    %c0_66 = arith.constant 0 : index
    %80 = vector.load %arg9[%c0_64, %c0_65, %c0_66] : memref<1x64x128xf32, #tpu.memory_space<vmem>>, vector<1x64x128xf32>
    %81 = vector.shape_cast %80 : vector<1x64x128xf32> to vector<64x128xf32>
    %82 = vector.shape_cast %79 : vector<64x128xf32> to vector<1x64x128xf32>
    tpu.vector_store %arg9[%c0_64, %c0_65, %c0_66], %82 {strides = array<i32>} : memref<1x64x128xf32, #tpu.memory_space<vmem>>, vector<1x64x128xf32>,
    return
  }
  func.func @transform_0(%arg0: i32) -> (i32, i32, i32, i32) {
    %c0_i32 = arith.constant 0 : i32
    %c0_i32_0 = arith.constant 0 : i32
    %c0_i32_1 = arith.constant 0 : i32
    %c0_i32_2 = arith.constant 0 : i32
    return %arg0, %c0_i32, %c0_i32_0, %c0_i32_1 : i32, i32, i32, i32
  }
  func.func @transform_1(%arg0: i32) -> (i32, i32) {
    %c0_i32 = arith.constant 0 : i32
    %c0_i32_0 = arith.constant 0 : i32
    %c0_i32_1 = arith.constant 0 : i32
    return %c0_i32, %c0_i32_0 : i32, i32
  }
  func.func @transform_2(%arg0: i32) -> (i32, i32, i32) {
    %c0_i32 = arith.constant 0 : i32
    %c0_i32_0 = arith.constant 0 : i32
    %c0_i32_1 = arith.constant 0 : i32
    %c0_i32_2 = arith.constant 0 : i32
    return %c0_i32, %c0_i32_0, %c0_i32_1 : i32, i32, i32
  }
  func.func @transform_3(%arg0: i32) -> (i32, i32, i32) {
    %c0_i32 = arith.constant 0 : i32
    %c0_i32_0 = arith.constant 0 : i32
    %c0_i32_1 = arith.constant 0 : i32
    %c0_i32_2 = arith.constant 0 : i32
    return %c0_i32, %c0_i32_0, %c0_i32_1 : i32, i32, i32
  }
  func.func @transform_4(%arg0: i32) -> (i32, i32) {
    %c0_i32 = arith.constant 0 : i32
    %c0_i32_0 = arith.constant 0 : i32
    %c0_i32_1 = arith.constant 0 : i32
    return %c0_i32, %c0_i32_0 : i32, i32
  }
  func.func @transform_5(%arg0: i32) -> (i32, i32) {
    %c0_i32 = arith.constant 0 : i32
    %c0_i32_0 = arith.constant 0 : i32
    %c0_i32_1 = arith.constant 0 : i32
    return %c0_i32, %c0_i32_0 : i32, i32
  }
  func.func @transform_6(%arg0: i32) -> (i32, i32) {
    %c0_i32 = arith.constant 0 : i32
    %c0_i32_0 = arith.constant 0 : i32
    %c0_i32_1 = arith.constant 0 : i32
    return %c0_i32, %c0_i32_0 : i32, i32
  }
  func.func @transform_7(%arg0: i32) -> (i32, i32) {
    %c0_i32 = arith.constant 0 : i32
    %c0_i32_0 = arith.constant 0 : i32
    %c0_i32_1 = arith.constant 0 : i32
    return %c0_i32, %c0_i32_0 : i32, i32
  }
  func.func @transform_8(%arg0: i32) -> (i32, i32, i32) {
    %c0_i32 = arith.constant 0 : i32
    %c0_i32_0 = arith.constant 0 : i32
    %c0_i32_1 = arith.constant 0 : i32
    return %arg0, %c0_i32, %c0_i32_0 : i32, i32, i32
  }
}

</mosaic_0001>

<llo_original>
// kernel: skconv_pallas.1
$region0: #{skconv_pallas.1}
  #allocation0 [shape = 'u32[]', space=smem, size = 0x4, offset = 0x4, fixed_abs, tag = 'smem constant byte address 0x4 - core index']
  #allocation1 [shape = 'u32[144,128]{1,0:T(1,128)}', space=vmem, size = 0x12000, scoped, tag = 'internal scratch']
  %s0 = inlined_call_operand.vmem [shape: bf16[2,2,80,128], index: 0, kind: input, shape index: {}]
  %s1 = inlined_call_operand.vmem [shape: bf16[1280,256], index: 1, kind: input, shape index: {}]
  %s2 = inlined_call_operand.vmem [shape: f32[2,1,128], index: 2, kind: input, shape index: {}]
  %s3 = inlined_call_operand.vmem [shape: f32[2,1,128], index: 3, kind: input, shape index: {}]
  %s4 = inlined_call_operand.vmem [shape: f32[128,32], index: 4, kind: input, shape index: {}]
  %s5 = inlined_call_operand.vmem [shape: f32[1,32], index: 5, kind: input, shape index: {}]
  %s6 = inlined_call_operand.vmem [shape: f32[1,32], index: 6, kind: input, shape index: {}]
  %s7 = inlined_call_operand.vmem [shape: f32[32,64], index: 7, kind: input, shape index: {}]
  %s8 = inlined_call_operand.vmem [shape: f32[2,64,128], index: 8, kind: output, shape index: {}]
  %s9 = sld [smem:[#allocation0]]
  $region65: #{skconv_pallas.1} parent=0
    _
  %s11 = ssub.s32 1, %s9
  %s12 = scalar_select 0, %s11, %s9
  loop: start=0, step=1, limit=4
  $region2: #{skconv_pallas.1} parent=0 // loop_pre_header
    _
  $region3: #{skconv_pallas.1} parent=0 // loop_header
    %s14 = sphi 0, %s18
    %p15 = scmp.ge.s32.totalorder %s14, 4
    %s24 = sphi 0, %s26
    %s27 = sphi 0, %s24
    %s28 = sphi 0, %s27
    %s44 = sphi 0, %s28
    %s48 = sphi 0, %s48
    %s50 = sphi 0, %s48
    %s51 = sphi 0, %s50
    %s65 = sphi 0, %s51
    %s69 = sphi 0, %s69
    %s71 = sphi 0, %s69
    %s72 = sphi 0, %s71
    %s86 = sphi 0, %s72
    %s90 = sphi 0, %s90
    %s92 = sphi 0, %s90
    %s93 = sphi 0, %s92
    %s107 = sphi 0, %s93
    %s111 = sphi 0, %s111
    %s113 = sphi 0, %s111
    %s114 = sphi 0, %s113
    %s128 = sphi 0, %s114
    %s132 = sphi 0, %s132
    %s134 = sphi 0, %s132
    %s135 = sphi 0, %s134
    %s149 = sphi 0, %s135
    %s153 = sphi 0, %s153
    %s155 = sphi 0, %s153
    %s156 = sphi 0, %s155
    %s170 = sphi 0, %s156
    %s174 = sphi 0, %s174
    %s176 = sphi 0, %s174
    %s177 = sphi 0, %s176
    %s191 = sphi 0, %s177
    %s197 = sphi 0, %s199
    %s200 = sphi 0, %s197
    %s201 = sphi 0, %s200
    %s217 = sphi 0, %s201
  $region4: #{skconv_pallas.1} parent=0 // loop_header_branch
    %17 = sbr.rel (%p15) target = $region8
  $region5: #{skconv_pallas.1} parent=0 // loop_body
    %s19 = ssub.s32 %s14, 1
    %s20 = ssub.s32 %s14, 2
    %s21 = sadd.s32 %s14, 1
    %s22 = ssub.s32 %s14, %s21
    %p23 = scmp.eq.s32.totalorder %s22, 0
    %s25 = sadd.s32 %s24, 1
    %s26 = scalar_select %p23, %s24, %s25
    %p29 = pneg %p23
    %p30 = scmp.eq.s32.totalorder %s14, 1
    %p31 = por %p29, %p30
    %p32 = scmp.ne.s32.totalorder %s24, %s27
    %p33 = scmp.eq.s32.totalorder %s14, 0
    %p34 = por %p32, %p33
    %p35 = scmp.ne.s32.totalorder %s24, %s27
    %p36 = scmp.eq.s32.totalorder %s19, 1
    %p37 = por %p35, %p36
    %p38 = scmp.ne.s32.totalorder %s27, %s28
    %p39 = scmp.eq.s32.totalorder %s19, 0
    %p40 = por %p38, %p39
    %p41 = scmp.ne.s32.totalorder %s27, %s28
    %p42 = scmp.eq.s32.totalorder %s20, 1
    %p43 = por %p41, %p42
    %p45 = scmp.ne.s32.totalorder %s28, %s44
    %p46 = scmp.eq.s32.totalorder %s20, 0
    %p47 = por %p45, %p46
    %s49 = sadd.s32 %s48, 1
    %p52 = scmp.eq.s32.totalorder %s14, 1
    %p53 = scmp.ne.s32.totalorder %s48, %s50
    %p54 = scmp.eq.s32.totalorder %s14, 0
    %p55 = por %p53, %p54
    %p56 = scmp.ne.s32.totalorder %s48, %s50
    %p57 = scmp.eq.s32.totalorder %s19, 1
    %p58 = por %p56, %p57
    %p59 = scmp.ne.s32.totalorder %s50, %s51
    %p60 = scmp.eq.s32.totalorder %s19, 0
    %p61 = por %p59, %p60
    %p62 = scmp.ne.s32.totalorder %s50, %s51
    %p63 = scmp.eq.s32.totalorder %s20, 1
    %p64 = por %p62, %p63
    %p66 = scmp.ne.s32.totalorder %s51, %s65
    %p67 = scmp.eq.s32.totalorder %s20, 0
    %p68 = por %p66, %p67
    %s70 = sadd.s32 %s69, 1
    %p73 = scmp.eq.s32.totalorder %s14, 1
    %p74 = scmp.ne.s32.totalorder %s69, %s71
    %p75 = scmp.eq.s32.totalorder %s14, 0
    %p76 = por %p74, %p75
    %p77 = scmp.ne.s32.totalorder %s69, %s71
    %p78 = scmp.eq.s32.totalorder %s19, 1
    %p79 = por %p77, %p78
    %p80 = scmp.ne.s32.totalorder %s71, %s72
    %p81 = scmp.eq.s32.totalorder %s19, 0
    %p82 = por %p80, %p81
    %p83 = scmp.ne.s32.totalorder %s71, %s72
    %p84 = scmp.eq.s32.totalorder %s20, 1
    %p85 = por %p83, %p84
    %p87 = scmp.ne.s32.totalorder %s72, %s86
    %p88 = scmp.eq.s32.totalorder %s20, 0
    %p89 = por %p87, %p88
    %s91 = sadd.s32 %s90, 1
    %p94 = scmp.eq.s32.totalorder %s14, 1
    %p95 = scmp.ne.s32.totalorder %s90, %s92
    %p96 = scmp.eq.s32.totalorder %s14, 0
    %p97 = por %p95, %p96
    %p98 = scmp.ne.s32.totalorder %s90, %s92
    %p99 = scmp.eq.s32.totalorder %s19, 1
    %p100 = por %p98, %p99
    %p101 = scmp.ne.s32.totalorder %s92, %s93
    %p102 = scmp.eq.s32.totalorder %s19, 0
    %p103 = por %p101, %p102
    %p104 = scmp.ne.s32.totalorder %s92, %s93
    %p105 = scmp.eq.s32.totalorder %s20, 1
    %p106 = por %p104, %p105
    %p108 = scmp.ne.s32.totalorder %s93, %s107
    %p109 = scmp.eq.s32.totalorder %s20, 0
    %p110 = por %p108, %p109
    %s112 = sadd.s32 %s111, 1
    %p115 = scmp.eq.s32.totalorder %s14, 1
    %p116 = scmp.ne.s32.totalorder %s111, %s113
    %p117 = scmp.eq.s32.totalorder %s14, 0
    %p118 = por %p116, %p117
    %p119 = scmp.ne.s32.totalorder %s111, %s113
    %p120 = scmp.eq.s32.totalorder %s19, 1
    %p121 = por %p119, %p120
    %p122 = scmp.ne.s32.totalorder %s113, %s114
    %p123 = scmp.eq.s32.totalorder %s19, 0
    %p124 = por %p122, %p123
    %p125 = scmp.ne.s32.totalorder %s113, %s114
    %p126 = scmp.eq.s32.totalorder %s20, 1
    %p127 = por %p125, %p126
    %p129 = scmp.ne.s32.totalorder %s114, %s128
    %p130 = scmp.eq.s32.totalorder %s20, 0
    %p131 = por %p129, %p130
    %s133 = sadd.s32 %s132, 1
    %p136 = scmp.eq.s32.totalorder %s14, 1
    %p137 = scmp.ne.s32.totalorder %s132, %s134
    %p138 = scmp.eq.s32.totalorder %s14, 0
    %p139 = por %p137, %p138
    %p140 = scmp.ne.s32.totalorder %s132, %s134
    %p141 = scmp.eq.s32.totalorder %s19, 1
    %p142 = por %p140, %p141
    %p143 = scmp.ne.s32.totalorder %s134, %s135
    %p144 = scmp.eq.s32.totalorder %s19, 0
    %p145 = por %p143, %p144
    %p146 = scmp.ne.s32.totalorder %s134, %s135
    %p147 = scmp.eq.s32.totalorder %s20, 1
    %p148 = por %p146, %p147
    %p150 = scmp.ne.s32.totalorder %s135, %s149
    %p151 = scmp.eq.s32.totalorder %s20, 0
    %p152 = por %p150, %p151
    %s154 = sadd.s32 %s153, 1
    %p157 = scmp.eq.s32.totalorder %s14, 1
    %p158 = scmp.ne.s32.totalorder %s153, %s155
    %p159 = scmp.eq.s32.totalorder %s14, 0
    %p160 = por %p158, %p159
    %p161 = scmp.ne.s32.totalorder %s153, %s155
    %p162 = scmp.eq.s32.totalorder %s19, 1
    %p163 = por %p161, %p162
    %p164 = scmp.ne.s32.totalorder %s155, %s156
    %p165 = scmp.eq.s32.totalorder %s19, 0
    %p166 = por %p164, %p165
    %p167 = scmp.ne.s32.totalorder %s155, %s156
    %p168 = scmp.eq.s32.totalorder %s20, 1
    %p169 = por %p167, %p168
    %p171 = scmp.ne.s32.totalorder %s156, %s170
    %p172 = scmp.eq.s32.totalorder %s20, 0
    %p173 = por %p171, %p172
    %s175 = sadd.s32 %s174, 1
    %p178 = scmp.eq.s32.totalorder %s14, 1
    %p179 = scmp.ne.s32.totalorder %s174, %s176
    %p180 = scmp.eq.s32.totalorder %s14, 0
    %p181 = por %p179, %p180
    %p182 = scmp.ne.s32.totalorder %s174, %s176
    %p183 = scmp.eq.s32.totalorder %s19, 1
    %p184 = por %p182, %p183
    %p185 = scmp.ne.s32.totalorder %s176, %s177
    %p186 = scmp.eq.s32.totalorder %s19, 0
    %p187 = por %p185, %p186
    %p188 = scmp.ne.s32.totalorder %s176, %s177
    %p189 = scmp.eq.s32.totalorder %s20, 1
    %p190 = por %p188, %p189
    %p192 = scmp.ne.s32.totalorder %s177, %s191
    %p193 = scmp.eq.s32.totalorder %s20, 0
    %p194 = por %p192, %p193
    %s195 = ssub.s32 %s14, %s21
    %p196 = scmp.eq.s32.totalorder %s195, 0
    %s198 = sadd.s32 %s197, 1
    %s199 = scalar_select %p196, %s197, %s198
    %p202 = pneg %p196
    %p203 = scmp.eq.s32.totalorder %s14, 1
    %p204 = por %p202, %p203
    %p205 = scmp.ne.s32.totalorder %s197, %s200
    %p206 = scmp.eq.s32.totalorder %s14, 0
    %p207 = por %p205, %p206
    %p208 = scmp.ne.s32.totalorder %s197, %s200
    %p209 = scmp.eq.s32.totalorder %s19, 1
    %p210 = por %p208, %p209
    %p211 = scmp.ne.s32.totalorder %s200, %s201
    %p212 = scmp.eq.s32.totalorder %s19, 0
    %p213 = por %p211, %p212
    %p214 = scmp.ne.s32.totalorder %s200, %s201
    %p215 = scmp.eq.s32.totalorder %s20, 1
    %p216 = por %p214, %p215
    %p218 = scmp.ne.s32.totalorder %s201, %s217
    %p219 = scmp.eq.s32.totalorder %s20, 0
    %p220 = por %p218, %p219
    %p221 = scmp.le.s32.totalorder 1, %s14
    %p222 = scmp.lt.s32.totalorder %s14, 3
    %p223 = pnand %p221, %p222
    %p224 = pneg %p223
    // Predicated region
    $region9: #{skconv_pallas.1} parent=5 // pred_check
      _
    $region10: #{skconv_pallas.1} parent=5 // pred_check_branch
      %226 = sbr.rel (%p223) target = $region12
    $region11: #{skconv_pallas.1} parent=5 // pred_region
      %s227 = ssub.s32 %s14, 1
      // Predicated region
      $region13: #{skconv_pallas.1} parent=11 // pred_check
        %p228 = pneg %p61
      $region14: #{skconv_pallas.1} parent=11 // pred_check_branch
        %230 = sbr.rel (%p228) target = $region16
      $region15: #{skconv_pallas.1} parent=11 // pred_region
        _
      $region16: #{skconv_pallas.1} parent=11 // pred_fallthru
        _
      // Predicated region
      $region17: #{skconv_pallas.1} parent=11 // pred_check
        %p231 = pneg %p82
      $region18: #{skconv_pallas.1} parent=11 // pred_check_branch
        %233 = sbr.rel (%p231) target = $region20
      $region19: #{skconv_pallas.1} parent=11 // pred_region
        _
      $region20: #{skconv_pallas.1} parent=11 // pred_fallthru
        _
      // Predicated region
      $region21: #{skconv_pallas.1} parent=11 // pred_check
        %p234 = pneg %p103
      $region22: #{skconv_pallas.1} parent=11 // pred_check_branch
        %236 = sbr.rel (%p234) target = $region24
      $region23: #{skconv_pallas.1} parent=11 // pred_region
        _
      $region24: #{skconv_pallas.1} parent=11 // pred_fallthru
        _
      // Predicated region
      $region25: #{skconv_pallas.1} parent=11 // pred_check
        %p237 = pneg %p124
      $region26: #{skconv_pallas.1} parent=11 // pred_check_branch
        %239 = sbr.rel (%p237) target = $region28
      $region27: #{skconv_pallas.1} parent=11 // pred_region
        _
      $region28: #{skconv_pallas.1} parent=11 // pred_fallthru
        _
      // Predicated region
      $region29: #{skconv_pallas.1} parent=11 // pred_check
        %p240 = pneg %p145
      $region30: #{skconv_pallas.1} parent=11 // pred_check_branch
        %242 = sbr.rel (%p240) target = $region32
      $region31: #{skconv_pallas.1} parent=11 // pred_region
        _
      $region32: #{skconv_pallas.1} parent=11 // pred_fallthru
        _
      // Predicated region
      $region33: #{skconv_pallas.1} parent=11 // pred_check
        %p243 = pneg %p166
      $region34: #{skconv_pallas.1} parent=11 // pred_check_branch
        %245 = sbr.rel (%p243) target = $region36
      $region35: #{skconv_pallas.1} parent=11 // pred_region
        _
      $region36: #{skconv_pallas.1} parent=11 // pred_fallthru
        _
      // Predicated region
      $region37: #{skconv_pallas.1} parent=11 // pred_check
        %p246 = pneg %p187
      $region38: #{skconv_pallas.1} parent=11 // pred_check_branch
        %248 = sbr.rel (%p246) target = $region40
      $region39: #{skconv_pallas.1} parent=11 // pred_region
        _
      $region40: #{skconv_pallas.1} parent=11 // pred_fallthru
        _
    $region12: #{skconv_pallas.1} parent=5 // pred_fallthru
      _
    %p249 = scmp.lt.s32.totalorder %s14, 2
    // Predicated region
    $region41: #{skconv_pallas.1} parent=5 // pred_check
      %p250 = pneg %p249
    $region42: #{skconv_pallas.1} parent=5 // pred_check_branch
      %252 = sbr.rel (%p250) target = $region44
    $region43: #{skconv_pallas.1} parent=5 // pred_region
      // Predicated region
      $region45: #{skconv_pallas.1} parent=43 // pred_check
        %p253 = pneg %p34
      $region46: #{skconv_pallas.1} parent=43 // pred_check_branch
        %255 = sbr.rel (%p253) target = $region48
      $region47: #{skconv_pallas.1} parent=43 // pred_region
        %p256 = scmp.lt.s32.totalorder %s14, 1
        %s257 = scalar_select %p256, %s14, 1
        %s258 = smul.addr %s257, 20
        %s259 = smul.addr %s258, 4
        %s260 = scalar_lea.vmem %s0, %s259
      $region48: #{skconv_pallas.1} parent=43 // pred_fallthru
        _
    $region44: #{skconv_pallas.1} parent=5 // pred_fallthru
      _
    %p261 = scmp.le.s32.totalorder 1, %s14
    %p262 = scmp.lt.s32.totalorder %s14, 3
    %p263 = pnand %p261, %p262
    %p264 = pneg %p263
    // Predicated region
    $region49: #{skconv_pallas.1} parent=5 // pred_check
      _
    $region50: #{skconv_pallas.1} parent=5 // pred_check_branch
      %266 = sbr.rel (%p263) target = $region52
    $region51: #{skconv_pallas.1} parent=5 // pred_region
      %s267 = ssub.s32 %s14, 1
      %p268 = scmp.lt.s32.totalorder %s19, 1
      %s269 = scalar_select %p268, %s19, 1
      %s270 = smul.addr %s269, 20
      %s271 = smul.addr %s270, 4
      %s272 = scalar_lea.vmem %s0, %s271
      %p273 = pneg %p40
      %p274 = pneg %p37
      %p275 = pneg %p61
      %p276 = pneg %p58
      %p277 = pneg %p82
      %p278 = pneg %p79
      %p279 = pneg %p103
      %p280 = pneg %p100
      %p281 = pneg %p124
      %p282 = pneg %p121
      %p283 = pneg %p145
      %p284 = pneg %p142
      %p285 = pneg %p166
      %p286 = pneg %p163
      %p287 = pneg %p187
      %p288 = pneg %p184
      %p289 = pneg %p213
      %p290 = pneg %p210
      %p291 = scmp.lt.s32.totalorder %s19, 1
      %s292 = scalar_select %p291, %s19, 1
      %s293 = smul.addr %s292, 8
      %s294 = smul.addr %s293, 8
      %s295 = scalar_lea.vmem %s8, %s294
      %p296 = scmp.lt.s32.totalorder %s19, 1
      %s297 = scalar_select %p296, %s19, 1
      %s298 = smul.addr %s297, 20
      %s299 = smul.addr %s298, 4
      %s300 = scalar_lea.vmem %s0, %s299
      %p301 = scmp.lt.s32.totalorder %s19, 1
      %s302 = scalar_select %p301, %s19, 1
      %s303 = smul.addr %s302, 8
      %s304 = smul.addr %s303, 8
      %s305 = scalar_lea.vmem %s8, %s304
      %v306 = vld [vmem:[%s300] sm:$0xf]
      %v307 = vld [vmem:[%s300 + $0x4] sm:$0xf]
      %v308 = vld [vmem:[%s300 + $0x8] sm:$0xf]
      %v309 = vld [vmem:[%s300 + $0xc] sm:$0xf]
      %v310 = vld [vmem:[%s300 + $0x10] sm:$0xf]
      %v311 = vld [vmem:[%s300 + $0x14] sm:$0xf]
      %v312 = vld [vmem:[%s300 + $0x18] sm:$0xf]
      %v313 = vld [vmem:[%s300 + $0x1c] sm:$0xf]
      %s314 = scalar_lea.vmem %s300, 40
      %v315 = vld [vmem:[%s314] sm:$0xf]
      %v316 = vld [vmem:[%s314 + $0x4] sm:$0xf]
      %v317 = vld [vmem:[%s314 + $0x8] sm:$0xf]
      %v318 = vld [vmem:[%s314 + $0xc] sm:$0xf]
      %v319 = vld [vmem:[%s314 + $0x10] sm:$0xf]
      %v320 = vld [vmem:[%s314 + $0x14] sm:$0xf]
      %v321 = vld [vmem:[%s314 + $0x18] sm:$0xf]
      %v322 = vld [vmem:[%s314 + $0x1c] sm:$0xf]
      %v323 = vld [vmem:[%s300] sm:$0xc]
      %v324 = vld [vmem:[%s300 + $0x20] sm:$0x3]
      %v325 = vld [vmem:[%s314] sm:$0xc]
      %v326 = vld [vmem:[%s314 + $0x20] sm:$0x3]
      %v327 = vld [vmem:[%s300 + $0x20] sm:$0xf]
      %v328 = vld [vmem:[%s314 + $0x20] sm:$0xf]
      %v329 = vld [vmem:[%s300 + $0x4] sm:$0xc]
      %v330 = vld [vmem:[%s300 + $0x24] sm:$0x3]
      %v331 = vld [vmem:[%s314 + $0x4] sm:$0xc]
      %v332 = vld [vmem:[%s314 + $0x24] sm:$0x3]
      %v333 = vld [vmem:[%s300 + $0x24] sm:$0xf]
      %v334 = vld [vmem:[%s314 + $0x24] sm:$0xf]
      %v343 = vunpack.c.l.b16 %v306
      %v344 = vunpack.c.l.b16 %v307
      %v345 = vunpack.c.l.b16 %v308
      %v346 = vunpack.c.l.b16 %v309
      %v347 = vunpack.c.l.b16 %v310
      %v348 = vunpack.c.l.b16 %v311
      %v349 = vunpack.c.l.b16 %v312
      %v350 = vunpack.c.l.b16 %v313
      %v351 = vpack.c.b16 %v344, %v343
      %v352 = vpack.c.b16 %v346, %v345
      %v353 = vpack.c.b16 %v348, %v347
      %v354 = vpack.c.b16 %v350, %v349
      %v367 = vunpack.c.l.b16 %v315
      %v368 = vunpack.c.l.b16 %v316
      %v369 = vunpack.c.l.b16 %v317
      %v370 = vunpack.c.l.b16 %v318
      %v371 = vunpack.c.l.b16 %v319
      %v372 = vunpack.c.l.b16 %v320
      %v373 = vunpack.c.l.b16 %v321
      %v374 = vunpack.c.l.b16 %v322
      %v375 = vpack.c.b16 %v368, %v367
      %v376 = vpack.c.b16 %v370, %v369
      %v377 = vpack.c.b16 %v372, %v371
      %v378 = vpack.c.b16 %v374, %v373
      %v385 = vunpack.c.l.b16 %v323
      %v386 = vunpack.c.l.b16 %v324
      %v387 = vpack.c.b16 %v344, %v385
      %v388 = vpack.c.b16 %v386, %v386
      %vm389 = vcmask 1045504
      %v390 = vrot.slane %v387, 2
      %v391 = vrot.slane %v352, 2
      %v392 = vsel %vm389, %v390, %v391
      %v393 = vrot.slane %v353, 2
      %v394 = vsel %vm389, %v391, %v393
      %v395 = vrot.slane %v354, 2
      %v396 = vsel %vm389, %v393, %v395
      %v397 = vrot.slane %v388, 2
      %v398 = vsel %vm389, %v395, %v397
      %v405 = vunpack.c.l.b16 %v325
      %v406 = vunpack.c.l.b16 %v326
      %v407 = vpack.c.b16 %v368, %v405
      %v408 = vpack.c.b16 %v406, %v406
      %v409 = vrot.slane %v407, 2
      %v410 = vrot.slane %v376, 2
      %v411 = vsel %vm389, %v409, %v410
      %v412 = vrot.slane %v377, 2
      %v413 = vsel %vm389, %v410, %v412
      %v414 = vrot.slane %v378, 2
      %v415 = vsel %vm389, %v412, %v414
      %v416 = vrot.slane %v408, 2
      %v417 = vsel %vm389, %v414, %v416
      %v423 = vunpack.c.l.b16 %v327
      %v424 = vpack.c.b16 %v345, %v344
      %v425 = vpack.c.b16 %v347, %v346
      %v426 = vpack.c.b16 %v349, %v348
      %v427 = vpack.c.b16 %v423, %v350
      %v433 = vunpack.c.l.b16 %v328
      %v434 = vpack.c.b16 %v369, %v368
      %v435 = vpack.c.b16 %v371, %v370
      %v436 = vpack.c.b16 %v373, %v372
      %v437 = vpack.c.b16 %v433, %v374
      %v444 = vunpack.c.l.b16 %v329
      %v445 = vunpack.c.l.b16 %v330
      %v446 = vpack.c.b16 %v345, %v444
      %v447 = vpack.c.b16 %v445, %v445
      %v448 = vrot.slane %v446, 2
      %v449 = vrot.slane %v425, 2
      %v450 = vsel %vm389, %v448, %v449
      %v451 = vrot.slane %v426, 2
      %v452 = vsel %vm389, %v449, %v451
      %v453 = vrot.slane %v427, 2
      %v454 = vsel %vm389, %v451, %v453
      %v455 = vrot.slane %v447, 2
      %v456 = vsel %vm389, %v453, %v455
      %v463 = vunpack.c.l.b16 %v331
      %v464 = vunpack.c.l.b16 %v332
      %v465 = vpack.c.b16 %v369, %v463
      %v466 = vpack.c.b16 %v464, %v464
      %v467 = vrot.slane %v465, 2
      %v468 = vrot.slane %v435, 2
      %v469 = vsel %vm389, %v467, %v468
      %v470 = vrot.slane %v436, 2
      %v471 = vsel %vm389, %v468, %v470
      %v472 = vrot.slane %v437, 2
      %v473 = vsel %vm389, %v470, %v472
      %v474 = vrot.slane %v466, 2
      %v475 = vsel %vm389, %v472, %v474
      %v481 = vunpack.c.l.b16 %v333
      %v482 = vpack.c.b16 %v481, %v423
      %v485 = vunpack.c.l.b16 %v334
      %v486 = vpack.c.b16 %v485, %v433
      %v488 = vld [vmem:[%s1] sm:$0xff]
      %v489 = vld [vmem:[%s1 + $0x8] sm:$0xff]
      %v490 = vld [vmem:[%s1 + $0x10] sm:$0xff]
      %v491 = vld [vmem:[%s1 + $0x18] sm:$0xff]
      %v492 = vld [vmem:[%s1 + $0x20] sm:$0xff]
      %v493 = vld [vmem:[%s1 + $0x28] sm:$0xff]
      %v494 = vld [vmem:[%s1 + $0x30] sm:$0xff]
      %v495 = vld [vmem:[%s1 + $0x38] sm:$0xff]
      %v496 = vld [vmem:[%s1 + $0x40] sm:$0xff]
      %v497 = vld [vmem:[%s1 + $0x48] sm:$0xff]
      %v498 = vld [vmem:[%s1 + $0x50] sm:$0xff]
      %v499 = vld [vmem:[%s1 + $0x58] sm:$0xff]
      %v500 = vld [vmem:[%s1 + $0x60] sm:$0xff]
      %v501 = vld [vmem:[%s1 + $0x68] sm:$0xff]
      %v502 = vld [vmem:[%s1 + $0x70] sm:$0xff]
      %v503 = vld [vmem:[%s1 + $0x78] sm:$0xff]
      %v504 = vld [vmem:[%s1 + $0x80] sm:$0xff]
      %v505 = vld [vmem:[%s1 + $0x88] sm:$0xff]
      %v506 = vld [vmem:[%s1 + $0x90] sm:$0xff]
      %v507 = vld [vmem:[%s1 + $0x98] sm:$0xff]
      %v508 = vld [vmem:[%s1 + $0xa0] sm:$0xff]
      %v509 = vld [vmem:[%s1 + $0xa8] sm:$0xff]
      %v510 = vld [vmem:[%s1 + $0xb0] sm:$0xff]
      %v511 = vld [vmem:[%s1 + $0xb8] sm:$0xff]
      %v512 = vld [vmem:[%s1 + $0xc0] sm:$0xff]
      %v513 = vld [vmem:[%s1 + $0xc8] sm:$0xff]
      %v514 = vld [vmem:[%s1 + $0xd0] sm:$0xff]
      %v515 = vld [vmem:[%s1 + $0xd8] sm:$0xff]
      %v516 = vld [vmem:[%s1 + $0xe0] sm:$0xff]
      %v517 = vld [vmem:[%s1 + $0xe8] sm:$0xff]
      %v518 = vld [vmem:[%s1 + $0xf0] sm:$0xff]
      %v519 = vld [vmem:[%s1 + $0xf8] sm:$0xff]
      %v520 = vld [vmem:[%s1 + $0x100] sm:$0xff]
      %v521 = vld [vmem:[%s1 + $0x108] sm:$0xff]
      %v522 = vld [vmem:[%s1 + $0x110] sm:$0xff]
      %v523 = vld [vmem:[%s1 + $0x118] sm:$0xff]
      %v524 = vld [vmem:[%s1 + $0x120] sm:$0xff]
      %v525 = vld [vmem:[%s1 + $0x128] sm:$0xff]
      %v526 = vld [vmem:[%s1 + $0x130] sm:$0xff]
      %v527 = vld [vmem:[%s1 + $0x138] sm:$0xff]
      %v528 = vld [vmem:[%s1 + $0x140] sm:$0xff]
      %v529 = vld [vmem:[%s1 + $0x148] sm:$0xff]
      %v530 = vld [vmem:[%s1 + $0x150] sm:$0xff]
      %v531 = vld [vmem:[%s1 + $0x158] sm:$0xff]
      %v532 = vld [vmem:[%s1 + $0x160] sm:$0xff]
      %v533 = vld [vmem:[%s1 + $0x168] sm:$0xff]
      %v534 = vld [vmem:[%s1 + $0x170] sm:$0xff]
      %v535 = vld [vmem:[%s1 + $0x178] sm:$0xff]
      %v536 = vld [vmem:[%s1 + $0x180] sm:$0xff]
      %v537 = vld [vmem:[%s1 + $0x188] sm:$0xff]
      %v538 = vld [vmem:[%s1 + $0x190] sm:$0xff]
      %v539 = vld [vmem:[%s1 + $0x198] sm:$0xff]
      %v540 = vld [vmem:[%s1 + $0x1a0] sm:$0xff]
      %v541 = vld [vmem:[%s1 + $0x1a8] sm:$0xff]
      %v542 = vld [vmem:[%s1 + $0x1b0] sm:$0xff]
      %v543 = vld [vmem:[%s1 + $0x1b8] sm:$0xff]
      %v544 = vld [vmem:[%s1 + $0x1c0] sm:$0xff]
      %v545 = vld [vmem:[%s1 + $0x1c8] sm:$0xff]
      %v546 = vld [vmem:[%s1 + $0x1d0] sm:$0xff]
      %v547 = vld [vmem:[%s1 + $0x1d8] sm:$0xff]
      %v548 = vld [vmem:[%s1 + $0x1e0] sm:$0xff]
      %v549 = vld [vmem:[%s1 + $0x1e8] sm:$0xff]
      %v550 = vld [vmem:[%s1 + $0x1f0] sm:$0xff]
      %v551 = vld [vmem:[%s1 + $0x1f8] sm:$0xff]
      %v552 = vld [vmem:[%s1 + $0x200] sm:$0xff]
      %v553 = vld [vmem:[%s1 + $0x208] sm:$0xff]
      %v554 = vld [vmem:[%s1 + $0x210] sm:$0xff]
      %v555 = vld [vmem:[%s1 + $0x218] sm:$0xff]
      %v556 = vld [vmem:[%s1 + $0x220] sm:$0xff]
      %v557 = vld [vmem:[%s1 + $0x228] sm:$0xff]
      %v558 = vld [vmem:[%s1 + $0x230] sm:$0xff]
      %v559 = vld [vmem:[%s1 + $0x238] sm:$0xff]
      %v560 = vld [vmem:[%s1 + $0x240] sm:$0xff]
      %v561 = vld [vmem:[%s1 + $0x248] sm:$0xff]
      %v562 = vld [vmem:[%s1 + $0x250] sm:$0xff]
      %v563 = vld [vmem:[%s1 + $0x258] sm:$0xff]
      %v564 = vld [vmem:[%s1 + $0x260] sm:$0xff]
      %v565 = vld [vmem:[%s1 + $0x268] sm:$0xff]
      %v566 = vld [vmem:[%s1 + $0x270] sm:$0xff]
      %v567 = vld [vmem:[%s1 + $0x278] sm:$0xff]
      %v568 = vld [vmem:[%s1 + $0x280] sm:$0xff]
      %v569 = vld [vmem:[%s1 + $0x288] sm:$0xff]
      %v570 = vld [vmem:[%s1 + $0x290] sm:$0xff]
      %v571 = vld [vmem:[%s1 + $0x298] sm:$0xff]
      %v572 = vld [vmem:[%s1 + $0x2a0] sm:$0xff]
      %v573 = vld [vmem:[%s1 + $0x2a8] sm:$0xff]
      %v574 = vld [vmem:[%s1 + $0x2b0] sm:$0xff]
      %v575 = vld [vmem:[%s1 + $0x2b8] sm:$0xff]
      %v576 = vld [vmem:[%s1 + $0x2c0] sm:$0xff]
      %v577 = vld [vmem:[%s1 + $0x2c8] sm:$0xff]
      %v578 = vld [vmem:[%s1 + $0x2d0] sm:$0xff]
      %v579 = vld [vmem:[%s1 + $0x2d8] sm:$0xff]
      %v580 = vld [vmem:[%s1 + $0x2e0] sm:$0xff]
      %v581 = vld [vmem:[%s1 + $0x2e8] sm:$0xff]
      %v582 = vld [vmem:[%s1 + $0x2f0] sm:$0xff]
      %v583 = vld [vmem:[%s1 + $0x2f8] sm:$0xff]
      %v584 = vld [vmem:[%s1 + $0x300] sm:$0xff]
      %v585 = vld [vmem:[%s1 + $0x308] sm:$0xff]
      %v586 = vld [vmem:[%s1 + $0x310] sm:$0xff]
      %v587 = vld [vmem:[%s1 + $0x318] sm:$0xff]
      %v588 = vld [vmem:[%s1 + $0x320] sm:$0xff]
      %v589 = vld [vmem:[%s1 + $0x328] sm:$0xff]
      %v590 = vld [vmem:[%s1 + $0x330] sm:$0xff]
      %v591 = vld [vmem:[%s1 + $0x338] sm:$0xff]
      %v592 = vld [vmem:[%s1 + $0x340] sm:$0xff]
      %v593 = vld [vmem:[%s1 + $0x348] sm:$0xff]
      %v594 = vld [vmem:[%s1 + $0x350] sm:$0xff]
      %v595 = vld [vmem:[%s1 + $0x358] sm:$0xff]
      %v596 = vld [vmem:[%s1 + $0x360] sm:$0xff]
      %v597 = vld [vmem:[%s1 + $0x368] sm:$0xff]
      %v598 = vld [vmem:[%s1 + $0x370] sm:$0xff]
      %v599 = vld [vmem:[%s1 + $0x378] sm:$0xff]
      %v600 = vld [vmem:[%s1 + $0x380] sm:$0xff]
      %v601 = vld [vmem:[%s1 + $0x388] sm:$0xff]
      %v602 = vld [vmem:[%s1 + $0x390] sm:$0xff]
      %v603 = vld [vmem:[%s1 + $0x398] sm:$0xff]
      %v604 = vld [vmem:[%s1 + $0x3a0] sm:$0xff]
      %v605 = vld [vmem:[%s1 + $0x3a8] sm:$0xff]
      %v606 = vld [vmem:[%s1 + $0x3b0] sm:$0xff]
      %v607 = vld [vmem:[%s1 + $0x3b8] sm:$0xff]
      %v608 = vld [vmem:[%s1 + $0x3c0] sm:$0xff]
      %v609 = vld [vmem:[%s1 + $0x3c8] sm:$0xff]
      %v610 = vld [vmem:[%s1 + $0x3d0] sm:$0xff]
      %v611 = vld [vmem:[%s1 + $0x3d8] sm:$0xff]
      %v612 = vld [vmem:[%s1 + $0x3e0] sm:$0xff]
      %v613 = vld [vmem:[%s1 + $0x3e8] sm:$0xff]
      %v614 = vld [vmem:[%s1 + $0x3f0] sm:$0xff]
      %v615 = vld [vmem:[%s1 + $0x3f8] sm:$0xff]
      %v616 = vld [vmem:[%s1 + $0x400] sm:$0xff]
      %v617 = vld [vmem:[%s1 + $0x408] sm:$0xff]
      %v618 = vld [vmem:[%s1 + $0x410] sm:$0xff]
      %v619 = vld [vmem:[%s1 + $0x418] sm:$0xff]
      %v620 = vld [vmem:[%s1 + $0x420] sm:$0xff]
      %v621 = vld [vmem:[%s1 + $0x428] sm:$0xff]
      %v622 = vld [vmem:[%s1 + $0x430] sm:$0xff]
      %v623 = vld [vmem:[%s1 + $0x438] sm:$0xff]
      %v624 = vld [vmem:[%s1 + $0x440] sm:$0xff]
      %v625 = vld [vmem:[%s1 + $0x448] sm:$0xff]
      %v626 = vld [vmem:[%s1 + $0x450] sm:$0xff]
      %v627 = vld [vmem:[%s1 + $0x458] sm:$0xff]
      %v628 = vld [vmem:[%s1 + $0x460] sm:$0xff]
      %v629 = vld [vmem:[%s1 + $0x468] sm:$0xff]
      %v630 = vld [vmem:[%s1 + $0x470] sm:$0xff]
      %v631 = vld [vmem:[%s1 + $0x478] sm:$0xff]
      %v632 = vld [vmem:[%s1 + $0x480] sm:$0xff]
      %v633 = vld [vmem:[%s1 + $0x488] sm:$0xff]
      %v634 = vld [vmem:[%s1 + $0x490] sm:$0xff]
      %v635 = vld [vmem:[%s1 + $0x498] sm:$0xff]
      %v636 = vld [vmem:[%s1 + $0x4a0] sm:$0xff]
      %v637 = vld [vmem:[%s1 + $0x4a8] sm:$0xff]
      %v638 = vld [vmem:[%s1 + $0x4b0] sm:$0xff]
      %v639 = vld [vmem:[%s1 + $0x4b8] sm:$0xff]
      %v640 = vld [vmem:[%s1 + $0x4c0] sm:$0xff]
      %v641 = vld [vmem:[%s1 + $0x4c8] sm:$0xff]
      %v642 = vld [vmem:[%s1 + $0x4d0] sm:$0xff]
      %v643 = vld [vmem:[%s1 + $0x4d8] sm:$0xff]
      %v644 = vld [vmem:[%s1 + $0x4e0] sm:$0xff]
      %v645 = vld [vmem:[%s1 + $0x4e8] sm:$0xff]
      %v646 = vld [vmem:[%s1 + $0x4f0] sm:$0xff]
      %v647 = vld [vmem:[%s1 + $0x4f8] sm:$0xff]
      %v808 = vunpack.c.l.b16 %v488
      %v809 = vunpack.c.h.b16 %v488
      %v810 = vunpack.c.l.b16 %v489
      %v811 = vunpack.c.h.b16 %v489
      %v812 = vunpack.c.l.b16 %v490
      %v813 = vunpack.c.h.b16 %v490
      %v814 = vunpack.c.l.b16 %v491
      %v815 = vunpack.c.h.b16 %v491
      %v816 = vunpack.c.l.b16 %v492
      %v817 = vunpack.c.h.b16 %v492
      %v818 = vunpack.c.l.b16 %v493
      %v819 = vunpack.c.h.b16 %v493
      %v820 = vunpack.c.l.b16 %v494
      %v821 = vunpack.c.h.b16 %v494
      %v822 = vunpack.c.l.b16 %v495
      %v823 = vunpack.c.h.b16 %v495
      %v824 = vunpack.c.l.b16 %v496
      %v825 = vunpack.c.h.b16 %v496
      %v826 = vunpack.c.l.b16 %v497
      %v827 = vunpack.c.h.b16 %v497
      %v828 = vunpack.c.l.b16 %v498
      %v829 = vunpack.c.h.b16 %v498
      %v830 = vunpack.c.l.b16 %v499
      %v831 = vunpack.c.h.b16 %v499
      %v832 = vunpack.c.l.b16 %v500
      %v833 = vunpack.c.h.b16 %v500
      %v834 = vunpack.c.l.b16 %v501
      %v835 = vunpack.c.h.b16 %v501
      %v836 = vunpack.c.l.b16 %v502
      %v837 = vunpack.c.h.b16 %v502
      %v838 = vunpack.c.l.b16 %v503
      %v839 = vunpack.c.h.b16 %v503
      %v840 = vunpack.c.l.b16 %v504
      %v841 = vunpack.c.h.b16 %v504
      %v842 = vunpack.c.l.b16 %v505
      %v843 = vunpack.c.h.b16 %v505
      %v844 = vunpack.c.l.b16 %v506
      %v845 = vunpack.c.h.b16 %v506
      %v846 = vunpack.c.l.b16 %v507
      %v847 = vunpack.c.h.b16 %v507
      %v848 = vunpack.c.l.b16 %v508
      %v849 = vunpack.c.h.b16 %v508
      %v850 = vunpack.c.l.b16 %v509
      %v851 = vunpack.c.h.b16 %v509
      %v852 = vunpack.c.l.b16 %v510
      %v853 = vunpack.c.h.b16 %v510
      %v854 = vunpack.c.l.b16 %v511
      %v855 = vunpack.c.h.b16 %v511
      %v856 = vunpack.c.l.b16 %v512
      %v857 = vunpack.c.h.b16 %v512
      %v858 = vunpack.c.l.b16 %v513
      %v859 = vunpack.c.h.b16 %v513
      %v860 = vunpack.c.l.b16 %v514
      %v861 = vunpack.c.h.b16 %v514
      %v862 = vunpack.c.l.b16 %v515
      %v863 = vunpack.c.h.b16 %v515
      %v864 = vunpack.c.l.b16 %v516
      %v865 = vunpack.c.h.b16 %v516
      %v866 = vunpack.c.l.b16 %v517
      %v867 = vunpack.c.h.b16 %v517
      %v868 = vunpack.c.l.b16 %v518
      %v869 = vunpack.c.h.b16 %v518
      %v870 = vunpack.c.l.b16 %v519
      %v871 = vunpack.c.h.b16 %v519
      %v872 = vunpack.c.l.b16 %v520
      %v873 = vunpack.c.h.b16 %v520
      %v874 = vunpack.c.l.b16 %v521
      %v875 = vunpack.c.h.b16 %v521
      %v876 = vunpack.c.l.b16 %v522
      %v877 = vunpack.c.h.b16 %v522
      %v878 = vunpack.c.l.b16 %v523
      %v879 = vunpack.c.h.b16 %v523
      %v880 = vunpack.c.l.b16 %v524
      %v881 = vunpack.c.h.b16 %v524
      %v882 = vunpack.c.l.b16 %v525
      %v883 = vunpack.c.h.b16 %v525
      %v884 = vunpack.c.l.b16 %v526
      %v885 = vunpack.c.h.b16 %v526
      %v886 = vunpack.c.l.b16 %v527
      %v887 = vunpack.c.h.b16 %v527
      %v888 = vunpack.c.l.b16 %v528
      %v889 = vunpack.c.h.b16 %v528
      %v890 = vunpack.c.l.b16 %v529
      %v891 = vunpack.c.h.b16 %v529
      %v892 = vunpack.c.l.b16 %v530
      %v893 = vunpack.c.h.b16 %v530
      %v894 = vunpack.c.l.b16 %v531
      %v895 = vunpack.c.h.b16 %v531
      %v896 = vunpack.c.l.b16 %v532
      %v897 = vunpack.c.h.b16 %v532
      %v898 = vunpack.c.l.b16 %v533
      %v899 = vunpack.c.h.b16 %v533
      %v900 = vunpack.c.l.b16 %v534
      %v901 = vunpack.c.h.b16 %v534
      %v902 = vunpack.c.l.b16 %v535
      %v903 = vunpack.c.h.b16 %v535
      %v904 = vunpack.c.l.b16 %v536
      %v905 = vunpack.c.h.b16 %v536
      %v906 = vunpack.c.l.b16 %v537
      %v907 = vunpack.c.h.b16 %v537
      %v908 = vunpack.c.l.b16 %v538
      %v909 = vunpack.c.h.b16 %v538
      %v910 = vunpack.c.l.b16 %v539
      %v911 = vunpack.c.h.b16 %v539
      %v912 = vunpack.c.l.b16 %v540
      %v913 = vunpack.c.h.b16 %v540
      %v914 = vunpack.c.l.b16 %v541
      %v915 = vunpack.c.h.b16 %v541
      %v916 = vunpack.c.l.b16 %v542
      %v917 = vunpack.c.h.b16 %v542
      %v918 = vunpack.c.l.b16 %v543
      %v919 = vunpack.c.h.b16 %v543
      %v920 = vunpack.c.l.b16 %v544
      %v921 = vunpack.c.h.b16 %v544
      %v922 = vunpack.c.l.b16 %v545
      %v923 = vunpack.c.h.b16 %v545
      %v924 = vunpack.c.l.b16 %v546
      %v925 = vunpack.c.h.b16 %v546
      %v926 = vunpack.c.l.b16 %v547
      %v927 = vunpack.c.h.b16 %v547
      %v928 = vunpack.c.l.b16 %v548
      %v929 = vunpack.c.h.b16 %v548
      %v930 = vunpack.c.l.b16 %v549
      %v931 = vunpack.c.h.b16 %v549
      %v932 = vunpack.c.l.b16 %v550
      %v933 = vunpack.c.h.b16 %v550
      %v934 = vunpack.c.l.b16 %v551
      %v935 = vunpack.c.h.b16 %v551
      %v936 = vunpack.c.l.b16 %v552
      %v937 = vunpack.c.h.b16 %v552
      %v938 = vunpack.c.l.b16 %v553
      %v939 = vunpack.c.h.b16 %v553
      %v940 = vunpack.c.l.b16 %v554
      %v941 = vunpack.c.h.b16 %v554
      %v942 = vunpack.c.l.b16 %v555
      %v943 = vunpack.c.h.b16 %v555
      %v944 = vunpack.c.l.b16 %v556
      %v945 = vunpack.c.h.b16 %v556
      %v946 = vunpack.c.l.b16 %v557
      %v947 = vunpack.c.h.b16 %v557
      %v948 = vunpack.c.l.b16 %v558
      %v949 = vunpack.c.h.b16 %v558
      %v950 = vunpack.c.l.b16 %v559
      %v951 = vunpack.c.h.b16 %v559
      %v952 = vunpack.c.l.b16 %v560
      %v953 = vunpack.c.h.b16 %v560
      %v954 = vunpack.c.l.b16 %v561
      %v955 = vunpack.c.h.b16 %v561
      %v956 = vunpack.c.l.b16 %v562
      %v957 = vunpack.c.h.b16 %v562
      %v958 = vunpack.c.l.b16 %v563
      %v959 = vunpack.c.h.b16 %v563
      %v960 = vunpack.c.l.b16 %v564
      %v961 = vunpack.c.h.b16 %v564
      %v962 = vunpack.c.l.b16 %v565
      %v963 = vunpack.c.h.b16 %v565
      %v964 = vunpack.c.l.b16 %v566
      %v965 = vunpack.c.h.b16 %v566
      %v966 = vunpack.c.l.b16 %v567
      %v967 = vunpack.c.h.b16 %v567
      %v968 = vunpack.c.l.b16 %v568
      %v969 = vunpack.c.h.b16 %v568
      %v970 = vunpack.c.l.b16 %v569
      %v971 = vunpack.c.h.b16 %v569
      %v972 = vunpack.c.l.b16 %v570
      %v973 = vunpack.c.h.b16 %v570
      %v974 = vunpack.c.l.b16 %v571
      %v975 = vunpack.c.h.b16 %v571
      %v976 = vunpack.c.l.b16 %v572
      %v977 = vunpack.c.h.b16 %v572
      %v978 = vunpack.c.l.b16 %v573
      %v979 = vunpack.c.h.b16 %v573
      %v980 = vunpack.c.l.b16 %v574
      %v981 = vunpack.c.h.b16 %v574
      %v982 = vunpack.c.l.b16 %v575
      %v983 = vunpack.c.h.b16 %v575
      %v984 = vunpack.c.l.b16 %v576
      %v985 = vunpack.c.h.b16 %v576
      %v986 = vunpack.c.l.b16 %v577
      %v987 = vunpack.c.h.b16 %v577
      %v988 = vunpack.c.l.b16 %v578
      %v989 = vunpack.c.h.b16 %v578
      %v990 = vunpack.c.l.b16 %v579
      %v991 = vunpack.c.h.b16 %v579
      %v992 = vunpack.c.l.b16 %v580
      %v993 = vunpack.c.h.b16 %v580
      %v994 = vunpack.c.l.b16 %v581
      %v995 = vunpack.c.h.b16 %v581
      %v996 = vunpack.c.l.b16 %v582
      %v997 = vunpack.c.h.b16 %v582
      %v998 = vunpack.c.l.b16 %v583
      %v999 = vunpack.c.h.b16 %v583
      %v1000 = vunpack.c.l.b16 %v584
      %v1001 = vunpack.c.h.b16 %v584
      %v1002 = vunpack.c.l.b16 %v585
      %v1003 = vunpack.c.h.b16 %v585
      %v1004 = vunpack.c.l.b16 %v586
      %v1005 = vunpack.c.h.b16 %v586
      %v1006 = vunpack.c.l.b16 %v587
      %v1007 = vunpack.c.h.b16 %v587
      %v1008 = vunpack.c.l.b16 %v588
      %v1009 = vunpack.c.h.b16 %v588
      %v1010 = vunpack.c.l.b16 %v589
      %v1011 = vunpack.c.h.b16 %v589
      %v1012 = vunpack.c.l.b16 %v590
      %v1013 = vunpack.c.h.b16 %v590
      %v1014 = vunpack.c.l.b16 %v591
      %v1015 = vunpack.c.h.b16 %v591
      %v1016 = vunpack.c.l.b16 %v592
      %v1017 = vunpack.c.h.b16 %v592
      %v1018 = vunpack.c.l.b16 %v593
      %v1019 = vunpack.c.h.b16 %v593
      %v1020 = vunpack.c.l.b16 %v594
      %v1021 = vunpack.c.h.b16 %v594
      %v1022 = vunpack.c.l.b16 %v595
      %v1023 = vunpack.c.h.b16 %v595
      %v1024 = vunpack.c.l.b16 %v596
      %v1025 = vunpack.c.h.b16 %v596
      %v1026 = vunpack.c.l.b16 %v597
      %v1027 = vunpack.c.h.b16 %v597
      %v1028 = vunpack.c.l.b16 %v598
      %v1029 = vunpack.c.h.b16 %v598
      %v1030 = vunpack.c.l.b16 %v599
      %v1031 = vunpack.c.h.b16 %v599
      %v1032 = vunpack.c.l.b16 %v600
      %v1033 = vunpack.c.h.b16 %v600
      %v1034 = vunpack.c.l.b16 %v601
      %v1035 = vunpack.c.h.b16 %v601
      %v1036 = vunpack.c.l.b16 %v602
      %v1037 = vunpack.c.h.b16 %v602
      %v1038 = vunpack.c.l.b16 %v603
      %v1039 = vunpack.c.h.b16 %v603
      %v1040 = vunpack.c.l.b16 %v604
      %v1041 = vunpack.c.h.b16 %v604
      %v1042 = vunpack.c.l.b16 %v605
      %v1043 = vunpack.c.h.b16 %v605
      %v1044 = vunpack.c.l.b16 %v606
      %v1045 = vunpack.c.h.b16 %v606
      %v1046 = vunpack.c.l.b16 %v607
      %v1047 = vunpack.c.h.b16 %v607
      %v1048 = vunpack.c.l.b16 %v608
      %v1049 = vunpack.c.h.b16 %v608
      %v1050 = vunpack.c.l.b16 %v609
      %v1051 = vunpack.c.h.b16 %v609
      %v1052 = vunpack.c.l.b16 %v610
      %v1053 = vunpack.c.h.b16 %v610
      %v1054 = vunpack.c.l.b16 %v611
      %v1055 = vunpack.c.h.b16 %v611
      %v1056 = vunpack.c.l.b16 %v612
      %v1057 = vunpack.c.h.b16 %v612
      %v1058 = vunpack.c.l.b16 %v613
      %v1059 = vunpack.c.h.b16 %v613
      %v1060 = vunpack.c.l.b16 %v614
      %v1061 = vunpack.c.h.b16 %v614
      %v1062 = vunpack.c.l.b16 %v615
      %v1063 = vunpack.c.h.b16 %v615
      %v1064 = vunpack.c.l.b16 %v616
      %v1065 = vunpack.c.h.b16 %v616
      %v1066 = vunpack.c.l.b16 %v617
      %v1067 = vunpack.c.h.b16 %v617
      %v1068 = vunpack.c.l.b16 %v618
      %v1069 = vunpack.c.h.b16 %v618
      %v1070 = vunpack.c.l.b16 %v619
      %v1071 = vunpack.c.h.b16 %v619
      %v1072 = vunpack.c.l.b16 %v620
      %v1073 = vunpack.c.h.b16 %v620
      %v1074 = vunpack.c.l.b16 %v621
      %v1075 = vunpack.c.h.b16 %v621
      %v1076 = vunpack.c.l.b16 %v622
      %v1077 = vunpack.c.h.b16 %v622
      %v1078 = vunpack.c.l.b16 %v623
      %v1079 = vunpack.c.h.b16 %v623
      %v1080 = vunpack.c.l.b16 %v624
      %v1081 = vunpack.c.h.b16 %v624
      %v1082 = vunpack.c.l.b16 %v625
      %v1083 = vunpack.c.h.b16 %v625
      %v1084 = vunpack.c.l.b16 %v626
      %v1085 = vunpack.c.h.b16 %v626
      %v1086 = vunpack.c.l.b16 %v627
      %v1087 = vunpack.c.h.b16 %v627
      %v1088 = vunpack.c.l.b16 %v628
      %v1089 = vunpack.c.h.b16 %v628
      %v1090 = vunpack.c.l.b16 %v629
      %v1091 = vunpack.c.h.b16 %v629
      %v1092 = vunpack.c.l.b16 %v630
      %v1093 = vunpack.c.h.b16 %v630
      %v1094 = vunpack.c.l.b16 %v631
      %v1095 = vunpack.c.h.b16 %v631
      %v1096 = vunpack.c.l.b16 %v632
      %v1097 = vunpack.c.h.b16 %v632
      %v1098 = vunpack.c.l.b16 %v633
      %v1099 = vunpack.c.h.b16 %v633
      %v1100 = vunpack.c.l.b16 %v634
      %v1101 = vunpack.c.h.b16 %v634
      %v1102 = vunpack.c.l.b16 %v635
      %v1103 = vunpack.c.h.b16 %v635
      %v1104 = vunpack.c.l.b16 %v636
      %v1105 = vunpack.c.h.b16 %v636
      %v1106 = vunpack.c.l.b16 %v637
      %v1107 = vunpack.c.h.b16 %v637
      %v1108 = vunpack.c.l.b16 %v638
      %v1109 = vunpack.c.h.b16 %v638
      %v1110 = vunpack.c.l.b16 %v639
      %v1111 = vunpack.c.h.b16 %v639
      %v1112 = vunpack.c.l.b16 %v640
      %v1113 = vunpack.c.h.b16 %v640
      %v1114 = vunpack.c.l.b16 %v641
      %v1115 = vunpack.c.h.b16 %v641
      %v1116 = vunpack.c.l.b16 %v642
      %v1117 = vunpack.c.h.b16 %v642
      %v1118 = vunpack.c.l.b16 %v643
      %v1119 = vunpack.c.h.b16 %v643
      %v1120 = vunpack.c.l.b16 %v644
      %v1121 = vunpack.c.h.b16 %v644
      %v1122 = vunpack.c.l.b16 %v645
      %v1123 = vunpack.c.h.b16 %v645
      %v1124 = vunpack.c.l.b16 %v646
      %v1125 = vunpack.c.h.b16 %v646
      %v1126 = vunpack.c.l.b16 %v647
      %v1127 = vunpack.c.h.b16 %v647
      %v1128 = vpack.c.b16 %v810, %v808
      %v1129 = vpack.c.b16 %v811, %v809
      %v1130 = vpack.c.b16 %v814, %v812
      %v1131 = vpack.c.b16 %v815, %v813
      %v1132 = vpack.c.b16 %v818, %v816
      %v1133 = vpack.c.b16 %v819, %v817
      %v1134 = vpack.c.b16 %v822, %v820
      %v1135 = vpack.c.b16 %v823, %v821
      %v1136 = vpack.c.b16 %v826, %v824
      %v1137 = vpack.c.b16 %v827, %v825
      %v1138 = vpack.c.b16 %v830, %v828
      %v1139 = vpack.c.b16 %v831, %v829
      %v1140 = vpack.c.b16 %v834, %v832
      %v1141 = vpack.c.b16 %v835, %v833
      %v1142 = vpack.c.b16 %v838, %v836
      %v1143 = vpack.c.b16 %v839, %v837
      %v1144 = vpack.c.b16 %v842, %v840
      %v1145 = vpack.c.b16 %v843, %v841
      %v1146 = vpack.c.b16 %v846, %v844
      %v1147 = vpack.c.b16 %v847, %v845
      %v1148 = vpack.c.b16 %v850, %v848
      %v1149 = vpack.c.b16 %v851, %v849
      %v1150 = vpack.c.b16 %v854, %v852
      %v1151 = vpack.c.b16 %v855, %v853
      %v1152 = vpack.c.b16 %v858, %v856
      %v1153 = vpack.c.b16 %v859, %v857
      %v1154 = vpack.c.b16 %v862, %v860
      %v1155 = vpack.c.b16 %v863, %v861
      %v1156 = vpack.c.b16 %v866, %v864
      %v1157 = vpack.c.b16 %v867, %v865
      %v1158 = vpack.c.b16 %v870, %v868
      %v1159 = vpack.c.b16 %v871, %v869
      %v1160 = vpack.c.b16 %v874, %v872
      %v1161 = vpack.c.b16 %v875, %v873
      %v1162 = vpack.c.b16 %v878, %v876
      %v1163 = vpack.c.b16 %v879, %v877
      %v1164 = vpack.c.b16 %v882, %v880
      %v1165 = vpack.c.b16 %v883, %v881
      %v1166 = vpack.c.b16 %v886, %v884
      %v1167 = vpack.c.b16 %v887, %v885
      %v1168 = vpack.c.b16 %v890, %v888
      %v1169 = vpack.c.b16 %v891, %v889
      %v1170 = vpack.c.b16 %v894, %v892
      %v1171 = vpack.c.b16 %v895, %v893
      %v1172 = vpack.c.b16 %v898, %v896
      %v1173 = vpack.c.b16 %v899, %v897
      %v1174 = vpack.c.b16 %v902, %v900
      %v1175 = vpack.c.b16 %v903, %v901
      %v1176 = vpack.c.b16 %v906, %v904
      %v1177 = vpack.c.b16 %v907, %v905
      %v1178 = vpack.c.b16 %v910, %v908
      %v1179 = vpack.c.b16 %v911, %v909
      %v1180 = vpack.c.b16 %v914, %v912
      %v1181 = vpack.c.b16 %v915, %v913
      %v1182 = vpack.c.b16 %v918, %v916
      %v1183 = vpack.c.b16 %v919, %v917
      %v1184 = vpack.c.b16 %v922, %v920
      %v1185 = vpack.c.b16 %v923, %v921
      %v1186 = vpack.c.b16 %v926, %v924
      %v1187 = vpack.c.b16 %v927, %v925
      %v1188 = vpack.c.b16 %v930, %v928
      %v1189 = vpack.c.b16 %v931, %v929
      %v1190 = vpack.c.b16 %v934, %v932
      %v1191 = vpack.c.b16 %v935, %v933
      %v1192 = vpack.c.b16 %v938, %v936
      %v1193 = vpack.c.b16 %v939, %v937
      %v1194 = vpack.c.b16 %v942, %v940
      %v1195 = vpack.c.b16 %v943, %v941
      %v1196 = vpack.c.b16 %v946, %v944
      %v1197 = vpack.c.b16 %v947, %v945
      %v1198 = vpack.c.b16 %v950, %v948
      %v1199 = vpack.c.b16 %v951, %v949
      %v1200 = vpack.c.b16 %v954, %v952
      %v1201 = vpack.c.b16 %v955, %v953
      %v1202 = vpack.c.b16 %v958, %v956
      %v1203 = vpack.c.b16 %v959, %v957
      %v1204 = vpack.c.b16 %v962, %v960
      %v1205 = vpack.c.b16 %v963, %v961
      %v1206 = vpack.c.b16 %v966, %v964
      %v1207 = vpack.c.b16 %v967, %v965
      %v1208 = vpack.c.b16 %v970, %v968
      %v1209 = vpack.c.b16 %v971, %v969
      %v1210 = vpack.c.b16 %v974, %v972
      %v1211 = vpack.c.b16 %v975, %v973
      %v1212 = vpack.c.b16 %v978, %v976
      %v1213 = vpack.c.b16 %v979, %v977
      %v1214 = vpack.c.b16 %v982, %v980
      %v1215 = vpack.c.b16 %v983, %v981
      %v1216 = vpack.c.b16 %v986, %v984
      %v1217 = vpack.c.b16 %v987, %v985
      %v1218 = vpack.c.b16 %v990, %v988
      %v1219 = vpack.c.b16 %v991, %v989
      %v1220 = vpack.c.b16 %v994, %v992
      %v1221 = vpack.c.b16 %v995, %v993
      %v1222 = vpack.c.b16 %v998, %v996
      %v1223 = vpack.c.b16 %v999, %v997
      %v1224 = vpack.c.b16 %v1002, %v1000
      %v1225 = vpack.c.b16 %v1003, %v1001
      %v1226 = vpack.c.b16 %v1006, %v1004
      %v1227 = vpack.c.b16 %v1007, %v1005
      %v1228 = vpack.c.b16 %v1010, %v1008
      %v1229 = vpack.c.b16 %v1011, %v1009
      %v1230 = vpack.c.b16 %v1014, %v1012
      %v1231 = vpack.c.b16 %v1015, %v1013
      %v1232 = vpack.c.b16 %v1018, %v1016
      %v1233 = vpack.c.b16 %v1019, %v1017
      %v1234 = vpack.c.b16 %v1022, %v1020
      %v1235 = vpack.c.b16 %v1023, %v1021
      %v1236 = vpack.c.b16 %v1026, %v1024
      %v1237 = vpack.c.b16 %v1027, %v1025
      %v1238 = vpack.c.b16 %v1030, %v1028
      %v1239 = vpack.c.b16 %v1031, %v1029
      %v1240 = vpack.c.b16 %v1034, %v1032
      %v1241 = vpack.c.b16 %v1035, %v1033
      %v1242 = vpack.c.b16 %v1038, %v1036
      %v1243 = vpack.c.b16 %v1039, %v1037
      %v1244 = vpack.c.b16 %v1042, %v1040
      %v1245 = vpack.c.b16 %v1043, %v1041
      %v1246 = vpack.c.b16 %v1046, %v1044
      %v1247 = vpack.c.b16 %v1047, %v1045
      %v1248 = vpack.c.b16 %v1050, %v1048
      %v1249 = vpack.c.b16 %v1051, %v1049
      %v1250 = vpack.c.b16 %v1054, %v1052
      %v1251 = vpack.c.b16 %v1055, %v1053
      %v1252 = vpack.c.b16 %v1058, %v1056
      %v1253 = vpack.c.b16 %v1059, %v1057
      %v1254 = vpack.c.b16 %v1062, %v1060
      %v1255 = vpack.c.b16 %v1063, %v1061
      %v1256 = vpack.c.b16 %v1066, %v1064
      %v1257 = vpack.c.b16 %v1067, %v1065
      %v1258 = vpack.c.b16 %v1070, %v1068
      %v1259 = vpack.c.b16 %v1071, %v1069
      %v1260 = vpack.c.b16 %v1074, %v1072
      %v1261 = vpack.c.b16 %v1075, %v1073
      %v1262 = vpack.c.b16 %v1078, %v1076
      %v1263 = vpack.c.b16 %v1079, %v1077
      %v1264 = vpack.c.b16 %v1082, %v1080
      %v1265 = vpack.c.b16 %v1083, %v1081
      %v1266 = vpack.c.b16 %v1086, %v1084
      %v1267 = vpack.c.b16 %v1087, %v1085
      %v1268 = vpack.c.b16 %v1090, %v1088
      %v1269 = vpack.c.b16 %v1091, %v1089
      %v1270 = vpack.c.b16 %v1094, %v1092
      %v1271 = vpack.c.b16 %v1095, %v1093
      %v1272 = vpack.c.b16 %v1098, %v1096
      %v1273 = vpack.c.b16 %v1099, %v1097
      %v1274 = vpack.c.b16 %v1102, %v1100
      %v1275 = vpack.c.b16 %v1103, %v1101
      %v1276 = vpack.c.b16 %v1106, %v1104
      %v1277 = vpack.c.b16 %v1107, %v1105
      %v1278 = vpack.c.b16 %v1110, %v1108
      %v1279 = vpack.c.b16 %v1111, %v1109
      %v1280 = vpack.c.b16 %v1114, %v1112
      %v1281 = vpack.c.b16 %v1115, %v1113
      %v1282 = vpack.c.b16 %v1118, %v1116
      %v1283 = vpack.c.b16 %v1119, %v1117
      %v1284 = vpack.c.b16 %v1122, %v1120
      %v1285 = vpack.c.b16 %v1123, %v1121
      %v1286 = vpack.c.b16 %v1126, %v1124
      %v1287 = vpack.c.b16 %v1127, %v1125
      %1448 = vmatprep.subr.bf16.mxu0 %v1129
      %1449 = vmatpush1.bf16.msra.mxu0 %v1128
      %1450 = vmatprep.subr.bf16.mxu0 %v1131
      %1451 = vmatpush1.bf16.msra.mxu0 %v1130
      %1452 = vmatprep.subr.bf16.mxu0 %v1133
      %1453 = vmatpush1.bf16.msra.mxu0 %v1132
      %1454 = vmatprep.subr.bf16.mxu0 %v1135
      %1455 = vmatpush1.bf16.msra.mxu0 %v1134
      %1456 = vmatprep.subr.bf16.mxu0 %v1137
      %1457 = vmatpush1.bf16.msra.mxu0 %v1136
      %1458 = vmatprep.subr.bf16.mxu0 %v1139
      %1459 = vmatpush1.bf16.msra.mxu0 %v1138
      %1460 = vmatprep.subr.bf16.mxu0 %v1141
      %1461 = vmatpush1.bf16.msra.mxu0 %v1140
      %1462 = vmatprep.subr.bf16.mxu0 %v1143
      %1463 = vmatpush1.bf16.msra.mxu0 %v1142
      %1464 = vmatprep.subr.bf16.mxu0 %v1145
      %1465 = vmatpush1.bf16.msra.mxu0 %v1144
      %1466 = vmatprep.subr.bf16.mxu0 %v1147
      %1467 = vmatpush1.bf16.msra.mxu0 %v1146
      %1468 = vmatprep.subr.bf16.mxu0 %v1149
      %1469 = vmatpush1.bf16.msra.mxu0 %v1148
      %1470 = vmatprep.subr.bf16.mxu0 %v1151
      %1471 = vmatpush1.bf16.msra.mxu0 %v1150
      %1472 = vmatprep.subr.bf16.mxu0 %v1153
      %1473 = vmatpush1.bf16.msra.mxu0 %v1152
      %1474 = vmatprep.subr.bf16.mxu0 %v1155
      %1475 = vmatpush1.bf16.msra.mxu0 %v1154
      %1476 = vmatprep.subr.bf16.mxu0 %v1157
      %1477 = vmatpush1.bf16.msra.mxu0 %v1156
      %1478 = vmatprep.subr.bf16.mxu0 %v1159
      %1479 = vmatpush1.bf16.msra.mxu0 %v1158
      %1480 = vmatprep.mubr.bf16.mxu0 %v375
      %1481 = vmatmul.mubr.bf16.gmra.mrb[0].mxu0 %v351
      %v1482 = vpop.f32.mrb[0].mxu0
      %v1483 = vadd.f32 0.0, %v1482
      %v1484 = vpop.f32.mrb[0].mxu0
      %v1485 = vadd.f32 0.0, %v1484
      %v1486 = vpop.f32.mrb[0].mxu0
      %v1487 = vadd.f32 0.0, %v1486
      %v1488 = vpop.f32.mrb[0].mxu0
      %v1489 = vadd.f32 0.0, %v1488
      %1490 = vmatprep.mubr.bf16.mxu0 %v376
      %1491 = vmatmul.mubr.bf16.gmra.mrb[0].mxu0 %v352
      %v1492 = vpop.f32.mrb[0].mxu0
      %v1493 = vadd.f32 0.0, %v1492
      %v1494 = vpop.f32.mrb[0].mxu0
      %v1495 = vadd.f32 0.0, %v1494
      %v1496 = vpop.f32.mrb[0].mxu0
      %v1497 = vadd.f32 0.0, %v1496
      %v1498 = vpop.f32.mrb[0].mxu0
      %v1499 = vadd.f32 0.0, %v1498
      %1500 = vmatprep.mubr.bf16.mxu0 %v377
      %1501 = vmatmul.mubr.bf16.gmra.mrb[0].mxu0 %v353
      %v1502 = vpop.f32.mrb[0].mxu0
      %v1503 = vadd.f32 0.0, %v1502
      %v1504 = vpop.f32.mrb[0].mxu0
      %v1505 = vadd.f32 0.0, %v1504
      %v1506 = vpop.f32.mrb[0].mxu0
      %v1507 = vadd.f32 0.0, %v1506
      %v1508 = vpop.f32.mrb[0].mxu0
      %v1509 = vadd.f32 0.0, %v1508
      %1510 = vmatprep.mubr.bf16.mxu0 %v378
      %1511 = vmatmul.mubr.bf16.gmra.mrb[0].mxu0 %v354
      %v1512 = vpop.f32.mrb[0].mxu0
      %v1513 = vadd.f32 0.0, %v1512
      %v1514 = vpop.f32.mrb[0].mxu0
      %v1515 = vadd.f32 0.0, %v1514
      %v1516 = vpop.f32.mrb[0].mxu0
      %v1517 = vadd.f32 0.0, %v1516
      %v1518 = vpop.f32.mrb[0].mxu0
      %v1519 = vadd.f32 0.0, %v1518
      %1520 = vdwg.mxu0
      %1521 = vmatprep.subr.bf16.mxu0 %v1161
      %1522 = vmatpush1.bf16.msra.mxu0 %v1160
      %1523 = vmatprep.subr.bf16.mxu0 %v1163
      %1524 = vmatpush1.bf16.msra.mxu0 %v1162
      %1525 = vmatprep.subr.bf16.mxu0 %v1165
      %1526 = vmatpush1.bf16.msra.mxu0 %v1164
      %1527 = vmatprep.subr.bf16.mxu0 %v1167
      %1528 = vmatpush1.bf16.msra.mxu0 %v1166
      %1529 = vmatprep.subr.bf16.mxu0 %v1169
      %1530 = vmatpush1.bf16.msra.mxu0 %v1168
      %1531 = vmatprep.subr.bf16.mxu0 %v1171
      %1532 = vmatpush1.bf16.msra.mxu0 %v1170
      %1533 = vmatprep.subr.bf16.mxu0 %v1173
      %1534 = vmatpush1.bf16.msra.mxu0 %v1172
      %1535 = vmatprep.subr.bf16.mxu0 %v1175
      %1536 = vmatpush1.bf16.msra.mxu0 %v1174
      %1537 = vmatprep.subr.bf16.mxu0 %v1177
      %1538 = vmatpush1.bf16.msra.mxu0 %v1176
      %1539 = vmatprep.subr.bf16.mxu0 %v1179
      %1540 = vmatpush1.bf16.msra.mxu0 %v1178
      %1541 = vmatprep.subr.bf16.mxu0 %v1181
      %1542 = vmatpush1.bf16.msra.mxu0 %v1180
      %1543 = vmatprep.subr.bf16.mxu0 %v1183
      %1544 = vmatpush1.bf16.msra.mxu0 %v1182
      %1545 = vmatprep.subr.bf16.mxu0 %v1185
      %1546 = vmatpush1.bf16.msra.mxu0 %v1184
      %1547 = vmatprep.subr.bf16.mxu0 %v1187
      %1548 = vmatpush1.bf16.msra.mxu0 %v1186
      %1549 = vmatprep.subr.bf16.mxu0 %v1189
      %1550 = vmatpush1.bf16.msra.mxu0 %v1188
      %1551 = vmatprep.subr.bf16.mxu0 %v1191
      %1552 = vmatpush1.bf16.msra.mxu0 %v1190
      %1553 = vmatprep.mubr.bf16.mxu0 %v411
      %1554 = vmatmul.mubr.bf16.gmra.mrb[0].mxu0 %v392
      %v1555 = vpop.f32.mrb[0].mxu0
      %v1556 = vadd.f32 %v1483, %v1555
      %v1557 = vpop.f32.mrb[0].mxu0
      %v1558 = vadd.f32 %v1485, %v1557
      %v1559 = vpop.f32.mrb[0].mxu0
      %v1560 = vadd.f32 %v1487, %v1559
      %v1561 = vpop.f32.mrb[0].mxu0
      %v1562 = vadd.f32 %v1489, %v1561
      %1563 = vmatprep.mubr.bf16.mxu0 %v413
      %1564 = vmatmul.mubr.bf16.gmra.mrb[0].mxu0 %v394
      %v1565 = vpop.f32.mrb[0].mxu0
      %v1566 = vadd.f32 %v1493, %v1565
      %v1567 = vpop.f32.mrb[0].mxu0
      %v1568 = vadd.f32 %v1495, %v1567
      %v1569 = vpop.f32.mrb[0].mxu0
      %v1570 = vadd.f32 %v1497, %v1569
      %v1571 = vpop.f32.mrb[0].mxu0
      %v1572 = vadd.f32 %v1499, %v1571
      %1573 = vmatprep.mubr.bf16.mxu0 %v415
      %1574 = vmatmul.mubr.bf16.gmra.mrb[0].mxu0 %v396
      %v1575 = vpop.f32.mrb[0].mxu0
      %v1576 = vadd.f32 %v1503, %v1575
      %v1577 = vpop.f32.mrb[0].mxu0
      %v1578 = vadd.f32 %v1505, %v1577
      %v1579 = vpop.f32.mrb[0].mxu0
      %v1580 = vadd.f32 %v1507, %v1579
      %v1581 = vpop.f32.mrb[0].mxu0
      %v1582 = vadd.f32 %v1509, %v1581
      %1583 = vmatprep.mubr.bf16.mxu0 %v417
      %1584 = vmatmul.mubr.bf16.gmra.mrb[0].mxu0 %v398
      %v1585 = vpop.f32.mrb[0].mxu0
      %v1586 = vadd.f32 %v1513, %v1585
      %v1587 = vpop.f32.mrb[0].mxu0
      %v1588 = vadd.f32 %v1515, %v1587
      %v1589 = vpop.f32.mrb[0].mxu0
      %v1590 = vadd.f32 %v1517, %v1589
      %v1591 = vpop.f32.mrb[0].mxu0
      %v1592 = vadd.f32 %v1519, %v1591
      %1593 = vdwg.mxu0
      %1594 = vmatprep.subr.bf16.mxu0 %v1193
      %1595 = vmatpush1.bf16.msra.mxu0 %v1192
      %1596 = vmatprep.subr.bf16.mxu0 %v1195
      %1597 = vmatpush1.bf16.msra.mxu0 %v1194
      %1598 = vmatprep.subr.bf16.mxu0 %v1197
      %1599 = vmatpush1.bf16.msra.mxu0 %v1196
      %1600 = vmatprep.subr.bf16.mxu0 %v1199
      %1601 = vmatpush1.bf16.msra.mxu0 %v1198
      %1602 = vmatprep.subr.bf16.mxu0 %v1201
      %1603 = vmatpush1.bf16.msra.mxu0 %v1200
      %1604 = vmatprep.subr.bf16.mxu0 %v1203
      %1605 = vmatpush1.bf16.msra.mxu0 %v1202
      %1606 = vmatprep.subr.bf16.mxu0 %v1205
      %1607 = vmatpush1.bf16.msra.mxu0 %v1204
      %1608 = vmatprep.subr.bf16.mxu0 %v1207
      %1609 = vmatpush1.bf16.msra.mxu0 %v1206
      %1610 = vmatprep.subr.bf16.mxu0 %v1209
      %1611 = vmatpush1.bf16.msra.mxu0 %v1208
      %1612 = vmatprep.subr.bf16.mxu0 %v1211
      %1613 = vmatpush1.bf16.msra.mxu0 %v1210
      %1614 = vmatprep.subr.bf16.mxu0 %v1213
      %1615 = vmatpush1.bf16.msra.mxu0 %v1212
      %1616 = vmatprep.subr.bf16.mxu0 %v1215
      %1617 = vmatpush1.bf16.msra.mxu0 %v1214
      %1618 = vmatprep.subr.bf16.mxu0 %v1217
      %1619 = vmatpush1.bf16.msra.mxu0 %v1216
      %1620 = vmatprep.subr.bf16.mxu0 %v1219
      %1621 = vmatpush1.bf16.msra.mxu0 %v1218
      %1622 = vmatprep.subr.bf16.mxu0 %v1221
      %1623 = vmatpush1.bf16.msra.mxu0 %v1220
      %1624 = vmatprep.subr.bf16.mxu0 %v1223
      %1625 = vmatpush1.bf16.msra.mxu0 %v1222
      %1626 = vmatprep.mubr.bf16.mxu0 %v434
      %1627 = vmatmul.mubr.bf16.gmra.mrb[0].mxu0 %v424
      %v1628 = vpop.f32.mrb[0].mxu0
      %v1629 = vadd.f32 %v1556, %v1628
      %v1630 = vpop.f32.mrb[0].mxu0
      %v1631 = vadd.f32 %v1558, %v1630
      %v1632 = vpop.f32.mrb[0].mxu0
      %v1633 = vadd.f32 %v1560, %v1632
      %v1634 = vpop.f32.mrb[0].mxu0
      %v1635 = vadd.f32 %v1562, %v1634
      %1636 = vmatprep.mubr.bf16.mxu0 %v435
      %1637 = vmatmul.mubr.bf16.gmra.mrb[0].mxu0 %v425
      %v1638 = vpop.f32.mrb[0].mxu0
      %v1639 = vadd.f32 %v1566, %v1638
      %v1640 = vpop.f32.mrb[0].mxu0
      %v1641 = vadd.f32 %v1568, %v1640
      %v1642 = vpop.f32.mrb[0].mxu0
      %v1643 = vadd.f32 %v1570, %v1642
      %v1644 = vpop.f32.mrb[0].mxu0
      %v1645 = vadd.f32 %v1572, %v1644
      %1646 = vmatprep.mubr.bf16.mxu0 %v436
      %1647 = vmatmul.mubr.bf16.gmra.mrb[0].mxu0 %v426
      %v1648 = vpop.f32.mrb[0].mxu0
      %v1649 = vadd.f32 %v1576, %v1648
      %v1650 = vpop.f32.mrb[0].mxu0
      %v1651 = vadd.f32 %v1578, %v1650
      %v1652 = vpop.f32.mrb[0].mxu0
      %v1653 = vadd.f32 %v1580, %v1652
      %v1654 = vpop.f32.mrb[0].mxu0
      %v1655 = vadd.f32 %v1582, %v1654
      %1656 = vmatprep.mubr.bf16.mxu0 %v437
      %1657 = vmatmul.mubr.bf16.gmra.mrb[0].mxu0 %v427
      %v1658 = vpop.f32.mrb[0].mxu0
      %v1659 = vadd.f32 %v1586, %v1658
      %v1660 = vpop.f32.mrb[0].mxu0
      %v1661 = vadd.f32 %v1588, %v1660
      %v1662 = vpop.f32.mrb[0].mxu0
      %v1663 = vadd.f32 %v1590, %v1662
      %v1664 = vpop.f32.mrb[0].mxu0
      %v1665 = vadd.f32 %v1592, %v1664
      %1666 = vdwg.mxu0
      %1667 = vmatprep.subr.bf16.mxu0 %v1225
      %1668 = vmatpush1.bf16.msra.mxu0 %v1224
      %1669 = vmatprep.subr.bf16.mxu0 %v1227
      %1670 = vmatpush1.bf16.msra.mxu0 %v1226
      %1671 = vmatprep.subr.bf16.mxu0 %v1229
      %1672 = vmatpush1.bf16.msra.mxu0 %v1228
      %1673 = vmatprep.subr.bf16.mxu0 %v1231
      %1674 = vmatpush1.bf16.msra.mxu0 %v1230
      %1675 = vmatprep.subr.bf16.mxu0 %v1233
      %1676 = vmatpush1.bf16.msra.mxu0 %v1232
      %1677 = vmatprep.subr.bf16.mxu0 %v1235
      %1678 = vmatpush1.bf16.msra.mxu0 %v1234
      %1679 = vmatprep.subr.bf16.mxu0 %v1237
      %1680 = vmatpush1.bf16.msra.mxu0 %v1236
      %1681 = vmatprep.subr.bf16.mxu0 %v1239
      %1682 = vmatpush1.bf16.msra.mxu0 %v1238
      %1683 = vmatprep.subr.bf16.mxu0 %v1241
      %1684 = vmatpush1.bf16.msra.mxu0 %v1240
      %1685 = vmatprep.subr.bf16.mxu0 %v1243
      %1686 = vmatpush1.bf16.msra.mxu0 %v1242
      %1687 = vmatprep.subr.bf16.mxu0 %v1245
      %1688 = vmatpush1.bf16.msra.mxu0 %v1244
      %1689 = vmatprep.subr.bf16.mxu0 %v1247
      %1690 = vmatpush1.bf16.msra.mxu0 %v1246
      %1691 = vmatprep.subr.bf16.mxu0 %v1249
      %1692 = vmatpush1.bf16.msra.mxu0 %v1248
      %1693 = vmatprep.subr.bf16.mxu0 %v1251
      %1694 = vmatpush1.bf16.msra.mxu0 %v1250
      %1695 = vmatprep.subr.bf16.mxu0 %v1253
      %1696 = vmatpush1.bf16.msra.mxu0 %v1252
      %1697 = vmatprep.subr.bf16.mxu0 %v1255
      %1698 = vmatpush1.bf16.msra.mxu0 %v1254
      %1699 = vmatprep.mubr.bf16.mxu0 %v469
      %1700 = vmatmul.mubr.bf16.gmra.mrb[0].mxu0 %v450
      %v1701 = vpop.f32.mrb[0].mxu0
      %v1702 = vadd.f32 %v1629, %v1701
      %v1703 = vpop.f32.mrb[0].mxu0
      %v1704 = vadd.f32 %v1631, %v1703
      %v1705 = vpop.f32.mrb[0].mxu0
      %v1706 = vadd.f32 %v1633, %v1705
      %v1707 = vpop.f32.mrb[0].mxu0
      %v1708 = vadd.f32 %v1635, %v1707
      %1709 = vmatprep.mubr.bf16.mxu0 %v471
      %1710 = vmatmul.mubr.bf16.gmra.mrb[0].mxu0 %v452
      %v1711 = vpop.f32.mrb[0].mxu0
      %v1712 = vadd.f32 %v1639, %v1711
      %v1713 = vpop.f32.mrb[0].mxu0
      %v1714 = vadd.f32 %v1641, %v1713
      %v1715 = vpop.f32.mrb[0].mxu0
      %v1716 = vadd.f32 %v1643, %v1715
      %v1717 = vpop.f32.mrb[0].mxu0
      %v1718 = vadd.f32 %v1645, %v1717
      %1719 = vmatprep.mubr.bf16.mxu0 %v473
      %1720 = vmatmul.mubr.bf16.gmra.mrb[0].mxu0 %v454
      %v1721 = vpop.f32.mrb[0].mxu0
      %v1722 = vadd.f32 %v1649, %v1721
      %v1723 = vpop.f32.mrb[0].mxu0
      %v1724 = vadd.f32 %v1651, %v1723
      %v1725 = vpop.f32.mrb[0].mxu0
      %v1726 = vadd.f32 %v1653, %v1725
      %v1727 = vpop.f32.mrb[0].mxu0
      %v1728 = vadd.f32 %v1655, %v1727
      %1729 = vmatprep.mubr.bf16.mxu0 %v475
      %1730 = vmatmul.mubr.bf16.gmra.mrb[0].mxu0 %v456
      %v1731 = vpop.f32.mrb[0].mxu0
      %v1732 = vadd.f32 %v1659, %v1731
      %v1733 = vpop.f32.mrb[0].mxu0
      %v1734 = vadd.f32 %v1661, %v1733
      %v1735 = vpop.f32.mrb[0].mxu0
      %v1736 = vadd.f32 %v1663, %v1735
      %v1737 = vpop.f32.mrb[0].mxu0
      %v1738 = vadd.f32 %v1665, %v1737
      %1739 = vdwg.mxu0
      %1740 = vmatprep.subr.bf16.mxu0 %v1257
      %1741 = vmatpush1.bf16.msra.mxu0 %v1256
      %1742 = vmatprep.subr.bf16.mxu0 %v1259
      %1743 = vmatpush1.bf16.msra.mxu0 %v1258
      %1744 = vmatprep.subr.bf16.mxu0 %v1261
      %1745 = vmatpush1.bf16.msra.mxu0 %v1260
      %1746 = vmatprep.subr.bf16.mxu0 %v1263
      %1747 = vmatpush1.bf16.msra.mxu0 %v1262
      %1748 = vmatprep.subr.bf16.mxu0 %v1265
      %1749 = vmatpush1.bf16.msra.mxu0 %v1264
      %1750 = vmatprep.subr.bf16.mxu0 %v1267
      %1751 = vmatpush1.bf16.msra.mxu0 %v1266
      %1752 = vmatprep.subr.bf16.mxu0 %v1269
      %1753 = vmatpush1.bf16.msra.mxu0 %v1268
      %1754 = vmatprep.subr.bf16.mxu0 %v1271
      %1755 = vmatpush1.bf16.msra.mxu0 %v1270
      %1756 = vmatprep.subr.bf16.mxu0 %v1273
      %1757 = vmatpush1.bf16.msra.mxu0 %v1272
      %1758 = vmatprep.subr.bf16.mxu0 %v1275
      %1759 = vmatpush1.bf16.msra.mxu0 %v1274
      %1760 = vmatprep.subr.bf16.mxu0 %v1277
      %1761 = vmatpush1.bf16.msra.mxu0 %v1276
      %1762 = vmatprep.subr.bf16.mxu0 %v1279
      %1763 = vmatpush1.bf16.msra.mxu0 %v1278
      %1764 = vmatprep.subr.bf16.mxu0 %v1281
      %1765 = vmatpush1.bf16.msra.mxu0 %v1280
      %1766 = vmatprep.subr.bf16.mxu0 %v1283
      %1767 = vmatpush1.bf16.msra.mxu0 %v1282
      %1768 = vmatprep.subr.bf16.mxu0 %v1285
      %1769 = vmatpush1.bf16.msra.mxu0 %v1284
      %1770 = vmatprep.subr.bf16.mxu0 %v1287
      %1771 = vmatpush1.bf16.msra.mxu0 %v1286
      %1772 = vmatprep.mubr.bf16.mxu0 %v376
      %1773 = vmatmul.mubr.bf16.gmra.mrb[0].mxu0 %v352
      %v1774 = vpop.f32.mrb[0].mxu0
      %v1775 = vadd.f32 %v1702, %v1774
      %v1776 = vpop.f32.mrb[0].mxu0
      %v1777 = vadd.f32 %v1704, %v1776
      %v1778 = vpop.f32.mrb[0].mxu0
      %v1779 = vadd.f32 %v1706, %v1778
      %v1780 = vpop.f32.mrb[0].mxu0
      %v1781 = vadd.f32 %v1708, %v1780
      %1782 = vmatprep.mubr.bf16.mxu0 %v377
      %1783 = vmatmul.mubr.bf16.gmra.mrb[0].mxu0 %v353
      %v1784 = vpop.f32.mrb[0].mxu0
      %v1785 = vadd.f32 %v1712, %v1784
      %v1786 = vpop.f32.mrb[0].mxu0
      %v1787 = vadd.f32 %v1714, %v1786
      %v1788 = vpop.f32.mrb[0].mxu0
      %v1789 = vadd.f32 %v1716, %v1788
      %v1790 = vpop.f32.mrb[0].mxu0
      %v1791 = vadd.f32 %v1718, %v1790
      %1792 = vmatprep.mubr.bf16.mxu0 %v378
      %1793 = vmatmul.mubr.bf16.gmra.mrb[0].mxu0 %v354
      %v1794 = vpop.f32.mrb[0].mxu0
      %v1795 = vadd.f32 %v1722, %v1794
      %v1796 = vpop.f32.mrb[0].mxu0
      %v1797 = vadd.f32 %v1724, %v1796
      %v1798 = vpop.f32.mrb[0].mxu0
      %v1799 = vadd.f32 %v1726, %v1798
      %v1800 = vpop.f32.mrb[0].mxu0
      %v1801 = vadd.f32 %v1728, %v1800
      %1802 = vmatprep.mubr.bf16.mxu0 %v486
      %1803 = vmatmul.mubr.bf16.gmra.mrb[0].mxu0 %v482
      %v1804 = vpop.f32.mrb[0].mxu0
      %v1805 = vadd.f32 %v1732, %v1804
      %v1806 = vpop.f32.mrb[0].mxu0
      %v1807 = vadd.f32 %v1734, %v1806
      %v1808 = vpop.f32.mrb[0].mxu0
      %v1809 = vadd.f32 %v1736, %v1808
      %v1810 = vpop.f32.mrb[0].mxu0
      %v1811 = vadd.f32 %v1738, %v1810
      %1812 = vdwg.mxu0
      %v1813 = vld [vmem:[%s2] sm:$0x1]
      %v1815 = vlaneseq
      %v1816 = vshrl.u32 %v1815, 7
      %v1817 = vsub.s32 0, %v1816
      %v1818 = vrot.slane %v1813, %v1817
      %v1820 = vmul.f32 %v1775, %v1818
      %v1821 = vmul.f32 %v1779, %v1818
      %v1822 = vmul.f32 %v1785, %v1818
      %v1823 = vmul.f32 %v1789, %v1818
      %v1824 = vmul.f32 %v1795, %v1818
      %v1825 = vmul.f32 %v1799, %v1818
      %v1826 = vmul.f32 %v1805, %v1818
      %v1827 = vmul.f32 %v1809, %v1818
      %v1828 = vld [vmem:[%s3] sm:$0x1]
      %v1830 = vlaneseq
      %v1831 = vshrl.u32 %v1830, 7
      %v1832 = vsub.s32 0, %v1831
      %v1833 = vrot.slane %v1828, %v1832
      %v1835 = vadd.f32 %v1820, %v1833
      %v1836 = vadd.f32 %v1821, %v1833
      %v1837 = vadd.f32 %v1822, %v1833
      %v1838 = vadd.f32 %v1823, %v1833
      %v1839 = vadd.f32 %v1824, %v1833
      %v1840 = vadd.f32 %v1825, %v1833
      %v1841 = vadd.f32 %v1826, %v1833
      %v1842 = vadd.f32 %v1827, %v1833
      %v1843 = vmax.f32 %v1835, 0.0
      %v1844 = vmax.f32 %v1836, 0.0
      %v1845 = vmax.f32 %v1837, 0.0
      %v1846 = vmax.f32 %v1838, 0.0
      %v1847 = vmax.f32 %v1839, 0.0
      %v1848 = vmax.f32 %v1840, 0.0
      %v1849 = vmax.f32 %v1841, 0.0
      %v1850 = vmax.f32 %v1842, 0.0
      %s1851 = scalar_lea.vmem %s2, 1
      %v1852 = vld [vmem:[%s1851] sm:$0x1]
      %v1854 = vlaneseq
      %v1855 = vshrl.u32 %v1854, 7
      %v1856 = vsub.s32 0, %v1855
      %v1857 = vrot.slane %v1852, %v1856
      %v1859 = vmul.f32 %v1777, %v1857
      %v1860 = vmul.f32 %v1781, %v1857
      %v1861 = vmul.f32 %v1787, %v1857
      %v1862 = vmul.f32 %v1791, %v1857
      %v1863 = vmul.f32 %v1797, %v1857
      %v1864 = vmul.f32 %v1801, %v1857
      %v1865 = vmul.f32 %v1807, %v1857
      %v1866 = vmul.f32 %v1811, %v1857
      %s1867 = scalar_lea.vmem %s3, 1
      %v1868 = vld [vmem:[%s1867] sm:$0x1]
      %v1870 = vlaneseq
      %v1871 = vshrl.u32 %v1870, 7
      %v1872 = vsub.s32 0, %v1871
      %v1873 = vrot.slane %v1868, %v1872
      %v1875 = vadd.f32 %v1859, %v1873
      %v1876 = vadd.f32 %v1860, %v1873
      %v1877 = vadd.f32 %v1861, %v1873
      %v1878 = vadd.f32 %v1862, %v1873
      %v1879 = vadd.f32 %v1863, %v1873
      %v1880 = vadd.f32 %v1864, %v1873
      %v1881 = vadd.f32 %v1865, %v1873
      %v1882 = vadd.f32 %v1866, %v1873
      %v1883 = vmax.f32 %v1875, 0.0
      %v1884 = vmax.f32 %v1876, 0.0
      %v1885 = vmax.f32 %v1877, 0.0
      %v1886 = vmax.f32 %v1878, 0.0
      %v1887 = vmax.f32 %v1879, 0.0
      %v1888 = vmax.f32 %v1880, 0.0
      %v1889 = vmax.f32 %v1881, 0.0
      %v1890 = vmax.f32 %v1882, 0.0
      %v1891 = vadd.f32 %v1843, %v1883
      %v1892 = vadd.f32 %v1844, %v1884
      %v1893 = vadd.f32 %v1845, %v1885
      %v1894 = vadd.f32 %v1846, %v1886
      %v1895 = vadd.f32 %v1847, %v1887
      %v1896 = vadd.f32 %v1848, %v1888
      %v1897 = vadd.f32 %v1849, %v1889
      %v1898 = vadd.f32 %v1850, %v1890
      %v1899 = vadd.f32 %v1891, %v1892
      %v1900 = vadd.f32 %v1899, %v1893
      %v1901 = vadd.f32 %v1900, %v1894
      %v1902 = vadd.f32 %v1901, %v1895
      %v1903 = vadd.f32 %v1902, %v1896
      %v1904 = vadd.f32 %v1903, %v1897
      %v1905 = vadd.f32 %v1904, %v1898
      %v1906 = vrot.slane %v1905, 4
      %v1907 = vadd.f32 %v1905, %v1906
      %v1908 = vrot.slane %v1907, 2
      %v1909 = vadd.f32 %v1907, %v1908
      %v1910 = vrot.slane %v1909, 1
      %v1911 = vadd.f32 %v1909, %v1910
      %v1912 = vmul.f32 %v1911, 0.00390625
      %v1913 = vld [vmem:[%s4] sm:$0xff]
      %v1914 = vld [vmem:[%s4 + $0x8] sm:$0xff]
      %v1915 = vld [vmem:[%s4 + $0x10] sm:$0xff]
      %v1916 = vld [vmem:[%s4 + $0x18] sm:$0xff]
      %v1917 = vld [vmem:[%s4 + $0x20] sm:$0xff]
      %v1918 = vld [vmem:[%s4 + $0x28] sm:$0xff]
      %v1919 = vld [vmem:[%s4 + $0x30] sm:$0xff]
      %v1920 = vld [vmem:[%s4 + $0x38] sm:$0xff]
      %v1921 = vld [vmem:[%s4 + $0x40] sm:$0xff]
      %v1922 = vld [vmem:[%s4 + $0x48] sm:$0xff]
      %v1923 = vld [vmem:[%s4 + $0x50] sm:$0xff]
      %v1924 = vld [vmem:[%s4 + $0x58] sm:$0xff]
      %v1925 = vld [vmem:[%s4 + $0x60] sm:$0xff]
      %v1926 = vld [vmem:[%s4 + $0x68] sm:$0xff]
      %v1927 = vld [vmem:[%s4 + $0x70] sm:$0xff]
      %v1928 = vld [vmem:[%s4 + $0x78] sm:$0xff]
      %1929 = vmatprep.subr.mxu0 0.0
      %1930 = vmatpush1.msra.mxu0 %v1913
      %1931 = vmatprep.subr.mxu0 0.0
      %1932 = vmatpush1.msra.mxu0 %v1914
      %1933 = vmatprep.subr.mxu0 0.0
      %1934 = vmatpush1.msra.mxu0 %v1915
      %1935 = vmatprep.subr.mxu0 0.0
      %1936 = vmatpush1.msra.mxu0 %v1916
      %1937 = vmatprep.subr.mxu0 0.0
      %1938 = vmatpush1.msra.mxu0 %v1917
      %1939 = vmatprep.subr.mxu0 0.0
      %1940 = vmatpush1.msra.mxu0 %v1918
      %1941 = vmatprep.subr.mxu0 0.0
      %1942 = vmatpush1.msra.mxu0 %v1919
      %1943 = vmatprep.subr.mxu0 0.0
      %1944 = vmatpush1.msra.mxu0 %v1920
      %1945 = vmatprep.subr.mxu0 0.0
      %1946 = vmatpush1.msra.mxu0 %v1921
      %1947 = vmatprep.subr.mxu0 0.0
      %1948 = vmatpush1.msra.mxu0 %v1922
      %1949 = vmatprep.subr.mxu0 0.0
      %1950 = vmatpush1.msra.mxu0 %v1923
      %1951 = vmatprep.subr.mxu0 0.0
      %1952 = vmatpush1.msra.mxu0 %v1924
      %1953 = vmatprep.subr.mxu0 0.0
      %1954 = vmatpush1.msra.mxu0 %v1925
      %1955 = vmatprep.subr.mxu0 0.0
      %1956 = vmatpush1.msra.mxu0 %v1926
      %1957 = vmatprep.subr.mxu0 0.0
      %1958 = vmatpush1.msra.mxu0 %v1927
      %1959 = vmatprep.subr.mxu0 0.0
      %1960 = vmatpush1.msra.mxu0 %v1928
      %1961 = vmatprep.subr.mxu0 0.0
      %1962 = vmatpush1.msra.mxu0 0.0
      %1963 = vmatprep.subr.mxu0 0.0
      %1964 = vmatpush1.msra.mxu0 0.0
      %1965 = vmatprep.subr.mxu0 0.0
      %1966 = vmatpush1.msra.mxu0 0.0
      %1967 = vmatprep.subr.mxu0 0.0
      %1968 = vmatpush1.msra.mxu0 0.0
      %1969 = vmatprep.subr.mxu0 0.0
      %1970 = vmatpush1.msra.mxu0 0.0
      %1971 = vmatprep.subr.mxu0 0.0
      %1972 = vmatpush1.msra.mxu0 0.0
      %1973 = vmatprep.subr.mxu0 0.0
      %1974 = vmatpush1.msra.mxu0 0.0
      %1975 = vmatprep.subr.mxu0 0.0
      %1976 = vmatpush1.msra.mxu0 0.0
      %1977 = vmatprep.subr.mxu0 0.0
      %1978 = vmatpush1.msra.mxu0 0.0
      %1979 = vmatprep.subr.mxu0 0.0
      %1980 = vmatpush1.msra.mxu0 0.0
      %1981 = vmatprep.subr.mxu0 0.0
      %1982 = vmatpush1.msra.mxu0 0.0
      %1983 = vmatprep.subr.mxu0 0.0
      %1984 = vmatpush1.msra.mxu0 0.0
      %1985 = vmatprep.subr.mxu0 0.0
      %1986 = vmatpush1.msra.mxu0 0.0
      %1987 = vmatprep.subr.mxu0 0.0
      %1988 = vmatpush1.msra.mxu0 0.0
      %1989 = vmatprep.subr.mxu0 0.0
      %1990 = vmatpush1.msra.mxu0 0.0
      %1991 = vmatprep.subr.mxu0 0.0
      %1992 = vmatpush1.msra.mxu0 0.0
      %1993 = vmatprep.mubr.f32.mxu0 0.0
      %1994 = vmatmul.mubr.f32.gmra.mrb[0].mxu0 %v1912
      %v1995 = vpop.f32.mrb[0].mxu0
      %v1996 = vadd.f32 0.0, %v1995
      %v1997 = vpop.f32.mrb[0].mxu0
      %1998 = vdwg.mxu0
      %v1999 = vld [vmem:[%s5] sm:$0x1]
      %v2000 = vmul.f32 %v1996, %v1999
      %v2001 = vld [vmem:[%s6] sm:$0x1]
      %v2002 = vadd.f32 %v2000, %v2001
      %v2003 = vmax.f32 %v2002, 0.0
      %v2004 = vld [vmem:[%s7] sm:$0xff]
      %v2005 = vld [vmem:[%s7 + $0x8] sm:$0xff]
      %v2006 = vld [vmem:[%s7 + $0x10] sm:$0xff]
      %v2007 = vld [vmem:[%s7 + $0x18] sm:$0xff]
      %vm2008 = vcmask 261120
      %v2010 = vsel %vm2008, %v2003, 0
      %2012 = vmatprep.subr.mxu0 0.0
      %2013 = vmatpush1.msra.mxu0 %v2004
      %2014 = vmatprep.subr.mxu0 0.0
      %2015 = vmatpush1.msra.mxu0 %v2005
      %2016 = vmatprep.subr.mxu0 0.0
      %2017 = vmatpush1.msra.mxu0 %v2006
      %2018 = vmatprep.subr.mxu0 0.0
      %2019 = vmatpush1.msra.mxu0 %v2007
      %2020 = vmatprep.subr.mxu0 0.0
      %2021 = vmatpush1.msra.mxu0 0.0
      %2022 = vmatprep.subr.mxu0 0.0
      %2023 = vmatpush1.msra.mxu0 0.0
      %2024 = vmatprep.subr.mxu0 0.0
      %2025 = vmatpush1.msra.mxu0 0.0
      %2026 = vmatprep.subr.mxu0 0.0
      %2027 = vmatpush1.msra.mxu0 0.0
      %2028 = vmatprep.subr.mxu0 0.0
      %2029 = vmatpush1.msra.mxu0 0.0
      %2030 = vmatprep.subr.mxu0 0.0
      %2031 = vmatpush1.msra.mxu0 0.0
      %2032 = vmatprep.subr.mxu0 0.0
      %2033 = vmatpush1.msra.mxu0 0.0
      %2034 = vmatprep.subr.mxu0 0.0
      %2035 = vmatpush1.msra.mxu0 0.0
      %2036 = vmatprep.subr.mxu0 0.0
      %2037 = vmatpush1.msra.mxu0 0.0
      %2038 = vmatprep.subr.mxu0 0.0
      %2039 = vmatpush1.msra.mxu0 0.0
      %2040 = vmatprep.subr.mxu0 0.0
      %2041 = vmatpush1.msra.mxu0 0.0
      %2042 = vmatprep.subr.mxu0 0.0
      %2043 = vmatpush1.msra.mxu0 0.0
      %2044 = vmatprep.subr.mxu0 0.0
      %2045 = vmatpush1.msra.mxu0 0.0
      %2046 = vmatprep.subr.mxu0 0.0
      %2047 = vmatpush1.msra.mxu0 0.0
      %2048 = vmatprep.subr.mxu0 0.0
      %2049 = vmatpush1.msra.mxu0 0.0
      %2050 = vmatprep.subr.mxu0 0.0
      %2051 = vmatpush1.msra.mxu0 0.0
      %2052 = vmatprep.subr.mxu0 0.0
      %2053 = vmatpush1.msra.mxu0 0.0
      %2054 = vmatprep.subr.mxu0 0.0
      %2055 = vmatpush1.msra.mxu0 0.0
      %2056 = vmatprep.subr.mxu0 0.0
      %2057 = vmatpush1.msra.mxu0 0.0
      %2058 = vmatprep.subr.mxu0 0.0
      %2059 = vmatpush1.msra.mxu0 0.0
      %2060 = vmatprep.subr.mxu0 0.0
      %2061 = vmatpush1.msra.mxu0 0.0
      %2062 = vmatprep.subr.mxu0 0.0
      %2063 = vmatpush1.msra.mxu0 0.0
      %2064 = vmatprep.subr.mxu0 0.0
      %2065 = vmatpush1.msra.mxu0 0.0
      %2066 = vmatprep.subr.mxu0 0.0
      %2067 = vmatpush1.msra.mxu0 0.0
      %2068 = vmatprep.subr.mxu0 0.0
      %2069 = vmatpush1.msra.mxu0 0.0
      %2070 = vmatprep.subr.mxu0 0.0
      %2071 = vmatpush1.msra.mxu0 0.0
      %2072 = vmatprep.subr.mxu0 0.0
      %2073 = vmatpush1.msra.mxu0 0.0
      %2074 = vmatprep.subr.mxu0 0.0
      %2075 = vmatpush1.msra.mxu0 0.0
      %2076 = vmatprep.mubr.f32.mxu0 0.0
      %2077 = vmatmul.mubr.f32.gmra.mrb[0].mxu0 %v2010
      %v2078 = vpop.f32.mrb[0].mxu0
      %v2079 = vadd.f32 0.0, %v2078
      %v2080 = vpop.f32.mrb[0].mxu0
      %2081 = vdwg.mxu0
      %2083 = vrot.lane.b32.xlu0 %v2079, 96
      %v2084 = vpop.permute.xlu0 %2083
      %v2086 = vmax.f32 %v2079, %v2084
      %v2087 = vsub.f32 %v2079, %v2086
      %v2088 = vmul.f32 %v2087, 1.442695
      %v2089 = vpow.pop %v2088
      %2091 = vrot.lane.b32.xlu0 %v2086, 32
      %v2092 = vpop.permute.xlu0 %2091
      %v2094 = vsub.f32 %v2079, %v2092
      %v2095 = vmul.f32 %v2094, 1.442695
      %v2096 = vpow.pop %v2095
      %2098 = vrot.lane.b32.xlu0 %v2096, 96
      %v2099 = vpop.permute.xlu0 %2098
      %v2101 = vadd.f32 %v2089, %v2099
      %v2102 = vrcp.pop %v2101
      %v2103 = vmul.f32 %v2089, %v2102
      %2105 = vrot.lane.b32.xlu0 %v2103, 32
      %v2106 = vpop.permute.xlu0 %2105
      %2108 = vrot.lane.b32.xlu0 %v2103, 64
      %v2109 = vpop.permute.xlu0 %2108
      %2111 = vrot.lane.b32.xlu0 %v2103, 96
      %v2112 = vpop.permute.xlu0 %2111
      %v2114 = vsel %vm2008, %v2103, %v2106
      %vm2115 = vcmask 523264
      %v2116 = vsel %vm2115, %v2114, %v2109
      %vm2117 = vcmask 785408
      %v2118 = vsel %vm2117, %v2116, %v2112
      %v2119 = vlaneseq
      %v2120 = vshrl.u32 %v2119, 7
      %v2121 = vsub.s32 0, %v2120
      %v2122 = vrot.slane %v2118, %v2121
      %v2123 = vmul.f32 %v1843, %v2122
      %v2124 = vmul.f32 %v1844, %v2122
      %v2125 = vmul.f32 %v1845, %v2122
      %v2126 = vmul.f32 %v1846, %v2122
      %v2127 = vmul.f32 %v1847, %v2122
      %v2128 = vmul.f32 %v1848, %v2122
      %v2129 = vmul.f32 %v1849, %v2122
      %v2130 = vmul.f32 %v1850, %v2122
      %v2131 = vadd.f32 %v2123, 0.0
      %v2132 = vadd.f32 %v2124, 0.0
      %v2133 = vadd.f32 %v2125, 0.0
      %v2134 = vadd.f32 %v2126, 0.0
      %v2135 = vadd.f32 %v2127, 0.0
      %v2136 = vadd.f32 %v2128, 0.0
      %v2137 = vadd.f32 %v2129, 0.0
      %v2138 = vadd.f32 %v2130, 0.0
      %2140 = vrot.lane.b32.xlu0 %v2102, 32
      %v2141 = vpop.permute.xlu0 %2140
      %v2143 = vmul.f32 %v2096, %v2141
      %2145 = vrot.lane.b32.xlu0 %v2143, 96
      %v2146 = vpop.permute.xlu0 %2145
      %2148 = vrot.lane.b32.xlu0 %v2143, 32
      %v2149 = vpop.permute.xlu0 %2148
      %2151 = vrot.lane.b32.xlu0 %v2143, 64
      %v2152 = vpop.permute.xlu0 %2151
      %v2154 = vsel %vm2008, %v2146, %v2143
      %v2155 = vsel %vm2115, %v2154, %v2149
      %v2156 = vsel %vm2117, %v2155, %v2152
      %v2157 = vlaneseq
      %v2158 = vshrl.u32 %v2157, 7
      %v2159 = vsub.s32 0, %v2158
      %v2160 = vrot.slane %v2156, %v2159
      %v2161 = vmul.f32 %v1883, %v2160
      %v2162 = vmul.f32 %v1884, %v2160
      %v2163 = vmul.f32 %v1885, %v2160
      %v2164 = vmul.f32 %v1886, %v2160
      %v2165 = vmul.f32 %v1887, %v2160
      %v2166 = vmul.f32 %v1888, %v2160
      %v2167 = vmul.f32 %v1889, %v2160
      %v2168 = vmul.f32 %v1890, %v2160
      %v2169 = vadd.f32 %v2131, %v2161
      %v2170 = vadd.f32 %v2132, %v2162
      %v2171 = vadd.f32 %v2133, %v2163
      %v2172 = vadd.f32 %v2134, %v2164
      %v2173 = vadd.f32 %v2135, %v2165
      %v2174 = vadd.f32 %v2136, %v2166
      %v2175 = vadd.f32 %v2137, %v2167
      %v2176 = vadd.f32 %v2138, %v2168
      %2177 = vst [vmem:[%s305] sm:$0xff] %v2169
      %2178 = vst [vmem:[%s305 + $0x8] sm:$0xff] %v2170
      %2179 = vst [vmem:[%s305 + $0x10] sm:$0xff] %v2171
      %2180 = vst [vmem:[%s305 + $0x18] sm:$0xff] %v2172
      %2181 = vst [vmem:[%s305 + $0x20] sm:$0xff] %v2173
      %2182 = vst [vmem:[%s305 + $0x28] sm:$0xff] %v2174
      %2183 = vst [vmem:[%s305 + $0x30] sm:$0xff] %v2175
      %2184 = vst [vmem:[%s305 + $0x38] sm:$0xff] %v2176
      %p2185 = scmp.lt.s32.totalorder %s19, 1
      %s2186 = scalar_select %p2185, %s19, 1
      %s2187 = smul.addr %s2186, 8
      %s2188 = smul.addr %s2187, 8
      %s2189 = scalar_lea.vmem %s8, %s2188
      // Predicated region
      $region53: #{skconv_pallas.1} parent=51 // pred_check
        %p2190 = pneg %p210
      $region54: #{skconv_pallas.1} parent=51 // pred_check_branch
        %2192 = sbr.rel (%p2190) target = $region56
      $region55: #{skconv_pallas.1} parent=51 // pred_region
        _
      $region56: #{skconv_pallas.1} parent=51 // pred_fallthru
        _
    $region52: #{skconv_pallas.1} parent=5 // pred_fallthru
      _
    %p2193 = scmp.le.s32.totalorder 2, %s14
    // Predicated region
    $region57: #{skconv_pallas.1} parent=5 // pred_check
      %p2194 = pneg %p2193
    $region58: #{skconv_pallas.1} parent=5 // pred_check_branch
      %2196 = sbr.rel (%p2194) target = $region60
    $region59: #{skconv_pallas.1} parent=5 // pred_region
      %s2197 = ssub.s32 %s14, 2
      // Predicated region
      $region61: #{skconv_pallas.1} parent=59 // pred_check
        %p2198 = pneg %p216
      $region62: #{skconv_pallas.1} parent=59 // pred_check_branch
        %2200 = sbr.rel (%p2198) target = $region64
      $region63: #{skconv_pallas.1} parent=59 // pred_region
        %p2201 = scmp.lt.s32.totalorder %s20, 1
        %s2202 = scalar_select %p2201, %s20, 1
        %s2203 = smul.addr %s2202, 8
        %s2204 = smul.addr %s2203, 8
        %s2205 = scalar_lea.vmem %s8, %s2204
      $region64: #{skconv_pallas.1} parent=59 // pred_fallthru
        _
    $region60: #{skconv_pallas.1} parent=5 // pred_fallthru
      _
  $region6: #{skconv_pallas.1} parent=0 // loop_footer
    %s18 = sadd.s32 1, %s14
  $region7: #{skconv_pallas.1} parent=0 // loop_footer_branch
    %13 = sbr.rel target = $region3
  $region8: #{skconv_pallas.1} parent=0 // loop_exit
    _

</llo_original>
